<compile_context>
chip_gen: v5e
topology: v5e:2x2
jax: 0.10.0
libtpu: 0.0.40
codegen_flags: <defaults>
</compile_context>

<pallas_src>
import math
import numpy as np
import jax
import jax.numpy as jnp
from jax import lax
from jax.experimental import pallas as pl
from jax.experimental.pallas import tpu as pltpu

# ----------------------- config -----------------------
N_EMBD = 64
N_HEAD = 4
HEAD_DIM = N_EMBD // N_HEAD          # 16 (even -> RoPE OK)
HALF = HEAD_DIM // 2                 # 8
FFN_HIDDEN = int(4.0 * N_EMBD)       # 256
ROPE_BASE = 10000.0
LN_EPS = 1e-5
SEQ_LEN = 16
BATCH = 2
BT = BATCH * SEQ_LEN                 # 32


# ----------------------- Pallas kernel -----------------------
def _layernorm(h, g, b, eps):
    mu = jnp.mean(h, axis=-1, keepdims=True)
    var = jnp.mean((h - mu) ** 2, axis=-1, keepdims=True)
    return (h - mu) * lax.rsqrt(var + eps) * g + b


def transformer_block_kernel(
    x_ref,
    ln1_g, ln1_b,
    wqkv, bqkv,
    wo, bo,
    cos_ref, sinl_ref, sinr_ref,
    mask_ref,
    ln2_g, ln2_b,
    w1, b1, w2, b2,
    o_ref,
):
    nh, D, H, C = N_HEAD, HEAD_DIM, HALF, N_EMBD

    x = x_ref[...]                                     # (BT, C) f32

    # ---------------- attention branch ----------------
    h1 = _layernorm(x, ln1_g[...], ln1_b[...], LN_EPS)
    qkv = jnp.dot(h1.astype(jnp.bfloat16), wqkv[...],
                  preferred_element_type=jnp.float32) + bqkv[...]
    q = qkv[:, :C]            # scale 1/sqrt(D) already folded into wq/bq
    k = qkv[:, C:2 * C]
    v_bf = qkv[:, 2 * C:].astype(jnp.bfloat16)

    # RoPE applied once on the whole q/k matrices in the per-head-contiguous
    # [h_even(8) | h_odd(8)] column layout (wrapper permutes q/k weight columns).
    # "rotate-half within each 16-wide head block" is built from two global
    # 8-lane rolls whose wrong (cross-block) positions are zeroed by the
    # precomputed sinL / sinR tables.
    cosT = cos_ref[...]                                # (BT, C)
    sinL = sinl_ref[...]                               # -sin on first halves, 0 elsewhere
    sinR = sinr_ref[...]                               # +sin on second halves, 0 elsewhere

    def rope(z):
        zl = jnp.concatenate([z[:, H:], z[:, :H]], axis=-1)    # roll left by 8
        zr = jnp.concatenate([z[:, -H:], z[:, :-H]], axis=-1)  # roll right by 8
        return z * cosT + zl * sinL + zr * sinR

    q_bf = rope(q).astype(jnp.bfloat16)
    k_bf = rope(k).astype(jnp.bfloat16)

    mask = mask_ref[...]                               # (BT, BT) additive, f32

    hv_list = []
    for h in range(nh):                                # static unroll, nh = 4
        sl = slice(h * D, (h + 1) * D)
        # single K=16 score dot per head (one MXU push)
        att = lax.dot_general(q_bf[:, sl], k_bf[:, sl], (((1,), (1,)), ((), ())),
                              preferred_element_type=jnp.float32)
        att = att + mask                               # block-diag causal mask
        att = att - jnp.max(att, axis=-1, keepdims=True)
        p = jnp.exp(att)
        l = jnp.sum(p, axis=-1, keepdims=True)         # (BT, 1)
        # issue the AV matmul immediately; normalize afterwards (EUP reciprocal
        # runs off the critical path, scale is on (BT, D) not (BT, BT))
        hv = jnp.dot(p.astype(jnp.bfloat16), v_bf[:, sl],
                     preferred_element_type=jnp.float32)
        hv_list.append(hv * pl.reciprocal(l, approx=True))

    # one fused K=64 out-projection instead of 4 per-head dots + adds
    y_heads = jnp.concatenate(hv_list, axis=-1).astype(jnp.bfloat16)   # (BT, C)
    y = jnp.dot(y_heads, wo[...], preferred_element_type=jnp.float32)
    x1 = x_ref[...] + y + bo[...]                      # residual 1 (x re-read)

    # ---------------- FFN branch ----------------
    h2 = _layernorm(x1, ln2_g[...], ln2_b[...], LN_EPS)
    f = jnp.dot(h2.astype(jnp.bfloat16), w1[...],
                preferred_element_type=jnp.float32) + b1[...]
    f = f * jax.nn.sigmoid(f)                          # swish / SiLU (f32 VPU+EUP)
    f = jnp.dot(f.astype(jnp.bfloat16), w2[...],
                preferred_element_type=jnp.float32) + b2[...]

    o_ref[...] = (x1 + f).astype(o_ref.dtype)          # residual 2


# ----------------------- one-time parameter packing (hoisted out of hot path) -----------------------
def pack_params(p):
    nh, D, H, C, T, B = N_HEAD, HEAD_DIM, HALF, N_EMBD, SEQ_LEN, BATCH

    # per-head-contiguous RoPE permutation: within each head block,
    # even dims first (8), odd dims second (8).
    perm = np.concatenate(
        [np.concatenate([h * D + np.arange(0, D, 2), h * D + np.arange(1, D, 2)])
         for h in range(nh)])

    scale = 1.0 / math.sqrt(D)                          # folded into q projection
    wq = (np.asarray(p['wq']) * scale)[:, perm]
    bq = (np.asarray(p['bq']) * scale)[perm]
    wk = np.asarray(p['wk'])[:, perm]
    bk = np.asarray(p['bk'])[perm]

    # fused QKV projection (bf16 operands for the MXU, f32 bias)
    wqkv = jnp.asarray(np.concatenate([wq, wk, np.asarray(p['wv'])], axis=1),
                       jnp.bfloat16)                    # (64, 192)
    bqkv = jnp.asarray(np.concatenate([bq, bk, np.asarray(p['bv'])])[None, :],
                       jnp.float32)                     # (1, 192)

    # RoPE tables matching the per-head-contiguous layout; row b*T+t uses position t.
    cos8 = np.asarray(p['cos'])                         # (T, 8)
    sin8 = np.asarray(p['sin'])
    zeros = np.zeros_like(sin8)
    cos_blk = np.concatenate([cos8, cos8], axis=1)      # (T, 16)
    sinl_blk = np.concatenate([-sin8, zeros], axis=1)   # -sin on first half
    sinr_blk = np.concatenate([zeros, sin8], axis=1)    # +sin on second half

    def tile_tbl(blk):
        return jnp.asarray(np.tile(np.tile(blk, (1, nh)), (B, 1)), jnp.float32)  # (BT, C)

    cosT, sinL, sinR = tile_tbl(cos_blk), tile_tbl(sinl_blk), tile_tbl(sinr_blk)

    # additive mask: causal within each batch's block, -1e30 across batches (f32).
    idx = np.arange(B * T)
    same_batch = (idx[:, None] // T) == (idx[None, :] // T)
    causal = (idx[None, :] % T) <= (idx[:, None] % T)
    mask = jnp.asarray(np.where(same_batch & causal, 0.0, -1e30), jnp.float32)

    def vec(a):  # (N,) -> (1, N) for a clean 2-D VMEM layout
        return jnp.asarray(np.asarray(a)[None, :], jnp.float32)

    return (
        vec(p['ln1_g']), vec(p['ln1_b']),
        wqkv, bqkv,
        jnp.asarray(p['wo'], jnp.bfloat16), vec(p['bo']),
        cosT, sinL, sinR,
        mask,
        vec(p['ln2_g']), vec(p['ln2_b']),
        jnp.asarray(p['w1'], jnp.bfloat16), vec(p['b1']),
        jnp.asarray(p['w2'], jnp.bfloat16), vec(p['b2']),
    )


# ----------------------- hot-path wrapper -----------------------
@jax.jit
def transformer_block_pallas(x, packed):
    B, T, C = x.shape
    bt = B * T
    inputs = (x.reshape(bt, C),) + tuple(packed)

    def full_spec(a):
        nd = a.ndim
        return pl.BlockSpec(a.shape, lambda i, _nd=nd: (0,) * _nd)

    out = pl.pallas_call(
        transformer_block_kernel,
        out_shape=jax.ShapeDtypeStruct((bt, C), jnp.float32),
        grid_spec=pltpu.PrefetchScalarGridSpec(
            num_scalar_prefetch=0,
            grid=(1,),                                  # single fused step (BT=32)
            in_specs=[full_spec(a) for a in inputs],
            out_specs=pl.BlockSpec((bt, C), lambda i: (0, 0)),
        ),
        compiler_params=pltpu.CompilerParams(
            dimension_semantics=("arbitrary",)),
    )(*inputs)
    return out.reshape(B, T, C)


# ----------------------- pure-JAX reference (mirrors the PyTorch forward) -----------------------
def reference_forward(x, p):
    B, T, C = x.shape
    nh, D = N_HEAD, HEAD_DIM

    def dot(a, b):
        return jnp.matmul(a, b, precision=lax.Precision.HIGHEST)

    def layernorm(h, g, b):
        mu = jnp.mean(h, axis=-1, keepdims=True)
        var = jnp.mean((h - mu) ** 2, axis=-1, keepdims=True)
        return (h - mu) * lax.rsqrt(var + LN_EPS) * g + b

    h1 = layernorm(x, p['ln1_g'], p['ln1_b'])
    q = dot(h1, p['wq']) + p['bq']
    k = dot(h1, p['wk']) + p['bk']
    v = dot(h1, p['wv']) + p['bv']
    q = q.reshape(B, T, nh, D).transpose(0, 2, 1, 3)
    k = k.reshape(B, T, nh, D).transpose(0, 2, 1, 3)
    v = v.reshape(B, T, nh, D).transpose(0, 2, 1, 3)

    cos = p['cos'][None, None]      # (1,1,T,D//2)
    sin = p['sin'][None, None]

    def rope(z):  # interleaved RoPE, exactly like apply_rope()
        z1 = z[..., 0::2]
        z2 = z[..., 1::2]
        n1 = z1 * cos - z2 * sin
        n2 = z1 * sin + z2 * cos
        return jnp.stack([n1, n2], axis=-1).reshape(z.shape)

    q = rope(q)
    k = rope(k)

    att = dot(q, k.transpose(0, 1, 3, 2)) * (1.0 / math.sqrt(D))
    mask = jnp.tril(jnp.ones((T, T), dtype=bool))
    att = jnp.where(mask[None, None], att, -jnp.inf)
    att = jax.nn.softmax(att, axis=-1)
    y = dot(att, v)                              # (B,nh,T,D)
    y = y.transpose(0, 2, 1, 3).reshape(B, T, C)
    y = dot(y, p['wo']) + p['bo']
    x = x + y

    h2 = layernorm(x, p['ln2_g'], p['ln2_b'])
    f = dot(h2, p['w1']) + p['b1']
    f = f * jax.nn.sigmoid(f)                    # swish
    f = dot(f, p['w2']) + p['b2']
    return x + f


# ----------------------- deterministic params -----------------------
def init_params(key):
    ks = jax.random.split(key, 16)
    s = 0.05
    p = {
        'ln1_g': 1.0 + 0.1 * jax.random.normal(ks[0], (N_EMBD,), jnp.float32),
        'ln1_b': 0.1 * jax.random.normal(ks[1], (N_EMBD,), jnp.float32),
        # weights stored as (in, out): y = x @ W + b  (== torch Linear with W = weight.T)
        'wq': s * jax.random.normal(ks[2], (N_EMBD, N_EMBD), jnp.float32),
        'bq': s * jax.random.normal(ks[3], (N_EMBD,), jnp.float32),
        'wk': s * jax.random.normal(ks[4], (N_EMBD, N_EMBD), jnp.float32),
        'bk': s * jax.random.normal(ks[5], (N_EMBD,), jnp.float32),
        'wv': s * jax.random.normal(ks[6], (N_EMBD, N_EMBD), jnp.float32),
        'bv': s * jax.random.normal(ks[7], (N_EMBD,), jnp.float32),
        'wo': s * jax.random.normal(ks[8], (N_EMBD, N_EMBD), jnp.float32),
        'bo': s * jax.random.normal(ks[9], (N_EMBD,), jnp.float32),
        'ln2_g': 1.0 + 0.1 * jax.random.normal(ks[10], (N_EMBD,), jnp.float32),
        'ln2_b': 0.1 * jax.random.normal(ks[11], (N_EMBD,), jnp.float32),
        'w1': s * jax.random.normal(ks[12], (N_EMBD, FFN_HIDDEN), jnp.float32),
        'b1': s * jax.random.normal(ks[13], (FFN_HIDDEN,), jnp.float32),
        'w2': s * jax.random.normal(ks[14], (FFN_HIDDEN, N_EMBD), jnp.float32),
        'b2': s * jax.random.normal(ks[15], (N_EMBD,), jnp.float32),
    }
    # RoPE tables exactly as the PyTorch RoPE module builds them
    inv_freq = 1.0 / (ROPE_BASE ** (np.arange(0, HEAD_DIM, 2, dtype=np.float32) / HEAD_DIM))
    t = np.arange(SEQ_LEN, dtype=np.float32)
    freqs = np.outer(t, inv_freq)                # (T, D//2)
    p['cos'] = jnp.asarray(np.cos(freqs), jnp.float32)
    p['sin'] = jnp.asarray(np.sin(freqs), jnp.float32)
    return p


if __name__ == "__main__":
    key = jax.random.PRNGKey(0)
    pkey, xkey = jax.random.split(key)
    params = init_params(pkey)
    x = jax.random.normal(xkey, (BATCH, SEQ_LEN, N_EMBD), jnp.float32)

    packed = pack_params(params)                 # one-time packing, out of the hot path
    out = transformer_block_pallas(x, packed)
    out = jax.block_until_ready(out)

    ref = reference_forward(x, params)
    err = float(jnp.max(jnp.abs(out - ref)))
    # Tolerance accounts for bf16 MXU operands (f32 accumulation) + approx reciprocal;
    # the reference is computed fully in f32 HIGHEST precision.
    if not np.allclose(np.asarray(out), np.asarray(ref), atol=2e-2, rtol=2e-2):
        raise AssertionError(f"Pallas output mismatch vs reference, max abs err = {err}")

    print("KERNEL_OK")
</pallas_src>

<mosaic_0001>
module attributes {stable_mosaic.version = 11 : i64} {
  func.func @transformer_block_kernel(%arg0: i32, %arg1: memref<32x64xf32, #tpu.memory_space<vmem>>, %arg2: memref<1x64xf32, #tpu.memory_space<vmem>>, %arg3: memref<1x64xf32, #tpu.memory_space<vmem>>, %arg4: memref<64x192xbf16, #tpu.memory_space<vmem>>, %arg5: memref<1x192xf32, #tpu.memory_space<vmem>>, %arg6: memref<64x64xbf16, #tpu.memory_space<vmem>>, %arg7: memref<1x64xf32, #tpu.memory_space<vmem>>, %arg8: memref<32x64xf32, #tpu.memory_space<vmem>>, %arg9: memref<32x64xf32, #tpu.memory_space<vmem>>, %arg10: memref<32x64xf32, #tpu.memory_space<vmem>>, %arg11: memref<32x32xf32, #tpu.memory_space<vmem>>, %arg12: memref<1x64xf32, #tpu.memory_space<vmem>>, %arg13: memref<1x64xf32, #tpu.memory_space<vmem>>, %arg14: memref<64x256xbf16, #tpu.memory_space<vmem>>, %arg15: memref<1x256xf32, #tpu.memory_space<vmem>>, %arg16: memref<256x64xbf16, #tpu.memory_space<vmem>>, %arg17: memref<1x64xf32, #tpu.memory_space<vmem>>, %arg18: memref<32x64xf32, #tpu.memory_space<vmem>>) attributes {dimension_semantics = [#tpu.dimension_semantics<arbitrary>], iteration_bounds = array<i64: 1>, scalar_prefetch = 0 : i64, scratch_operands = 0 : i64, tpu.core_type = #tpu.core_type<tc>, window_params = [{pipeline_mode = #tpu.pipeline_mode<synchronous>, transform_indices = @transform_0, window_bounds = array<i64: 32, 64>}, {pipeline_mode = #tpu.pipeline_mode<synchronous>, transform_indices = @transform_1, window_bounds = array<i64: 1, 64>}, {pipeline_mode = #tpu.pipeline_mode<synchronous>, transform_indices = @transform_2, window_bounds = array<i64: 1, 64>}, {pipeline_mode = #tpu.pipeline_mode<synchronous>, transform_indices = @transform_3, window_bounds = array<i64: 64, 192>}, {pipeline_mode = #tpu.pipeline_mode<synchronous>, transform_indices = @transform_4, window_bounds = array<i64: 1, 192>}, {pipeline_mode = #tpu.pipeline_mode<synchronous>, transform_indices = @transform_5, window_bounds = array<i64: 64, 64>}, {pipeline_mode = #tpu.pipeline_mode<synchronous>, transform_indices = @transform_6, window_bounds = array<i64: 1, 64>}, {pipeline_mode = #tpu.pipeline_mode<synchronous>, transform_indices = @transform_7, window_bounds = array<i64: 32, 64>}, {pipeline_mode = #tpu.pipeline_mode<synchronous>, transform_indices = @transform_8, window_bounds = array<i64: 32, 64>}, {pipeline_mode = #tpu.pipeline_mode<synchronous>, transform_indices = @transform_9, window_bounds = array<i64: 32, 64>}, {pipeline_mode = #tpu.pipeline_mode<synchronous>, transform_indices = @transform_10, window_bounds = array<i64: 32, 32>}, {pipeline_mode = #tpu.pipeline_mode<synchronous>, transform_indices = @transform_11, window_bounds = array<i64: 1, 64>}, {pipeline_mode = #tpu.pipeline_mode<synchronous>, transform_indices = @transform_12, window_bounds = array<i64: 1, 64>}, {pipeline_mode = #tpu.pipeline_mode<synchronous>, transform_indices = @transform_13, window_bounds = array<i64: 64, 256>}, {pipeline_mode = #tpu.pipeline_mode<synchronous>, transform_indices = @transform_14, window_bounds = array<i64: 1, 256>}, {pipeline_mode = #tpu.pipeline_mode<synchronous>, transform_indices = @transform_15, window_bounds = array<i64: 256, 64>}, {pipeline_mode = #tpu.pipeline_mode<synchronous>, transform_indices = @transform_16, window_bounds = array<i64: 1, 64>}, {pipeline_mode = #tpu.pipeline_mode<synchronous>, transform_indices = @transform_17, window_bounds = array<i64: 32, 64>}]} {
    %c0 = arith.constant 0 : index
    %c0_0 = arith.constant 0 : index
    %0 = vector.load %arg1[%c0, %c0_0] : memref<32x64xf32, #tpu.memory_space<vmem>>, vector<32x64xf32>
    %c0_1 = arith.constant 0 : index
    %c0_2 = arith.constant 0 : index
    %1 = vector.load %arg2[%c0_1, %c0_2] : memref<1x64xf32, #tpu.memory_space<vmem>>, vector<1x64xf32>
    %c0_3 = arith.constant 0 : index
    %c0_4 = arith.constant 0 : index
    %2 = vector.load %arg3[%c0_3, %c0_4] : memref<1x64xf32, #tpu.memory_space<vmem>>, vector<1x64xf32>
    %cst = arith.constant dense<0.000000e+00> : vector<32xf32>
    %3 = vector.multi_reduction <add>, %0, %cst [1] : vector<32x64xf32> to vector<32xf32>
    %4 = vector.shape_cast %3 : vector<32xf32> to vector<32x1xf32>
    %cst_5 = arith.constant 6.400000e+01 : f32
    %5 = vector.broadcast %cst_5 : f32 to vector<32x1xf32>
    %6 = arith.divf %4, %5 : vector<32x1xf32>
    %7 = vector.broadcast %6 : vector<32x1xf32> to vector<32x64xf32>
    %8 = arith.subf %0, %7 : vector<32x64xf32>
    %9 = arith.mulf %8, %8 : vector<32x64xf32>
    %cst_6 = arith.constant dense<0.000000e+00> : vector<32xf32>
    %10 = vector.multi_reduction <add>, %9, %cst_6 [1] : vector<32x64xf32> to vector<32xf32>
    %11 = vector.shape_cast %10 : vector<32xf32> to vector<32x1xf32>
    %cst_7 = arith.constant 6.400000e+01 : f32
    %12 = vector.broadcast %cst_7 : f32 to vector<32x1xf32>
    %13 = arith.divf %11, %12 : vector<32x1xf32>
    %14 = vector.broadcast %6 : vector<32x1xf32> to vector<32x64xf32>
    %15 = arith.subf %0, %14 : vector<32x64xf32>
    %cst_8 = arith.constant 9.99999974E-6 : f32
    %16 = vector.broadcast %cst_8 : f32 to vector<32x1xf32>
    %17 = arith.addf %13, %16 : vector<32x1xf32>
    %18 = math.rsqrt %17 : vector<32x1xf32>
    %19 = vector.broadcast %18 : vector<32x1xf32> to vector<32x64xf32>
    %20 = arith.mulf %15, %19 : vector<32x64xf32>
    %21 = vector.broadcast %1 : vector<1x64xf32> to vector<32x64xf32>
    %22 = arith.mulf %20, %21 : vector<32x64xf32>
    %23 = vector.broadcast %2 : vector<1x64xf32> to vector<32x64xf32>
    %24 = arith.addf %22, %23 : vector<32x64xf32>
    %25 = arith.truncf %24 : vector<32x64xf32> to vector<32x64xbf16>
    %c0_9 = arith.constant 0 : index
    %c0_10 = arith.constant 0 : index
    %26 = vector.load %arg4[%c0_9, %c0_10] : memref<64x192xbf16, #tpu.memory_space<vmem>>, vector<64x192xbf16>
    %cst_11 = arith.constant dense<0.000000e+00> : vector<32x192xf32>
    %27 = tpu.matmul %25, %26, %cst_11 {dimension_numbers = #tpu.dot_dimension_numbers<[1], [0], [0], [1], [0, 0, 1, 1], [], []>} : vector<32x64xbf16>, vector<64x192xbf16>, vector<32x192xf32> -> vector<32x192xf32>
    %c0_12 = arith.constant 0 : index
    %c0_13 = arith.constant 0 : index
    %28 = vector.load %arg5[%c0_12, %c0_13] : memref<1x192xf32, #tpu.memory_space<vmem>>, vector<1x192xf32>
    %29 = vector.broadcast %28 : vector<1x192xf32> to vector<32x192xf32>
    %30 = arith.addf %27, %29 : vector<32x192xf32>
    %31 = vector.extract_strided_slice %30 {offsets = [0, 0], sizes = [32, 64], strides = [1, 1]} : vector<32x192xf32> to vector<32x64xf32>
    %32 = vector.extract_strided_slice %30 {offsets = [0, 64], sizes = [32, 64], strides = [1, 1]} : vector<32x192xf32> to vector<32x64xf32>
    %33 = vector.extract_strided_slice %30 {offsets = [0, 128], sizes = [32, 64], strides = [1, 1]} : vector<32x192xf32> to vector<32x64xf32>
    %34 = arith.truncf %33 : vector<32x64xf32> to vector<32x64xbf16>
    %c0_14 = arith.constant 0 : index
    %c0_15 = arith.constant 0 : index
    %35 = vector.load %arg8[%c0_14, %c0_15] : memref<32x64xf32, #tpu.memory_space<vmem>>, vector<32x64xf32>
    %c0_16 = arith.constant 0 : index
    %c0_17 = arith.constant 0 : index
    %36 = vector.load %arg9[%c0_16, %c0_17] : memref<32x64xf32, #tpu.memory_space<vmem>>, vector<32x64xf32>
    %c0_18 = arith.constant 0 : index
    %c0_19 = arith.constant 0 : index
    %37 = vector.load %arg10[%c0_18, %c0_19] : memref<32x64xf32, #tpu.memory_space<vmem>>, vector<32x64xf32>
    %38 = vector.extract_strided_slice %31 {offsets = [0, 8], sizes = [32, 56], strides = [1, 1]} : vector<32x64xf32> to vector<32x56xf32>
    %39 = vector.extract_strided_slice %31 {offsets = [0, 0], sizes = [32, 8], strides = [1, 1]} : vector<32x64xf32> to vector<32x8xf32>
    %40 = tpu.concatenate %38, %39 in 1 : vector<32x56xf32>, vector<32x8xf32> -> vector<32x64xf32>
    %41 = vector.extract_strided_slice %31 {offsets = [0, 56], sizes = [32, 8], strides = [1, 1]} : vector<32x64xf32> to vector<32x8xf32>
    %42 = vector.extract_strided_slice %31 {offsets = [0, 0], sizes = [32, 56], strides = [1, 1]} : vector<32x64xf32> to vector<32x56xf32>
    %43 = tpu.concatenate %41, %42 in 1 : vector<32x8xf32>, vector<32x56xf32> -> vector<32x64xf32>
    %44 = arith.mulf %31, %35 : vector<32x64xf32>
    %45 = arith.mulf %40, %36 : vector<32x64xf32>
    %46 = arith.addf %44, %45 : vector<32x64xf32>
    %47 = arith.mulf %43, %37 : vector<32x64xf32>
    %48 = arith.addf %46, %47 : vector<32x64xf32>
    %49 = arith.truncf %48 : vector<32x64xf32> to vector<32x64xbf16>
    %50 = vector.extract_strided_slice %32 {offsets = [0, 8], sizes = [32, 56], strides = [1, 1]} : vector<32x64xf32> to vector<32x56xf32>
    %51 = vector.extract_strided_slice %32 {offsets = [0, 0], sizes = [32, 8], strides = [1, 1]} : vector<32x64xf32> to vector<32x8xf32>
    %52 = tpu.concatenate %50, %51 in 1 : vector<32x56xf32>, vector<32x8xf32> -> vector<32x64xf32>
    %53 = vector.extract_strided_slice %32 {offsets = [0, 56], sizes = [32, 8], strides = [1, 1]} : vector<32x64xf32> to vector<32x8xf32>
    %54 = vector.extract_strided_slice %32 {offsets = [0, 0], sizes = [32, 56], strides = [1, 1]} : vector<32x64xf32> to vector<32x56xf32>
    %55 = tpu.concatenate %53, %54 in 1 : vector<32x8xf32>, vector<32x56xf32> -> vector<32x64xf32>
    %56 = arith.mulf %32, %35 : vector<32x64xf32>
    %57 = arith.mulf %52, %36 : vector<32x64xf32>
    %58 = arith.addf %56, %57 : vector<32x64xf32>
    %59 = arith.mulf %55, %37 : vector<32x64xf32>
    %60 = arith.addf %58, %59 : vector<32x64xf32>
    %61 = arith.truncf %60 : vector<32x64xf32> to vector<32x64xbf16>
    %c0_20 = arith.constant 0 : index
    %c0_21 = arith.constant 0 : index
    %62 = vector.load %arg11[%c0_20, %c0_21] : memref<32x32xf32, #tpu.memory_space<vmem>>, vector<32x32xf32>
    %63 = vector.extract_strided_slice %49 {offsets = [0, 0], sizes = [32, 16], strides = [1, 1]} : vector<32x64xbf16> to vector<32x16xbf16>
    %64 = vector.extract_strided_slice %61 {offsets = [0, 0], sizes = [32, 16], strides = [1, 1]} : vector<32x64xbf16> to vector<32x16xbf16>
    %cst_22 = arith.constant dense<0.000000e+00> : vector<32x32xf32>
    %65 = tpu.matmul %63, %64, %cst_22 {dimension_numbers = #tpu.dot_dimension_numbers<[1], [1], [0], [0], [0, 0, 1, 0], [], []>} : vector<32x16xbf16>, vector<32x16xbf16>, vector<32x32xf32> -> vector<32x32xf32>
    %66 = arith.addf %65, %62 : vector<32x32xf32>
    %cst_23 = arith.constant dense<0xFF800000> : vector<32xf32>
    %67 = vector.multi_reduction <maximumf>, %66, %cst_23 [1] : vector<32x32xf32> to vector<32xf32>
    %68 = vector.shape_cast %67 : vector<32xf32> to vector<32x1xf32>
    %69 = vector.broadcast %68 : vector<32x1xf32> to vector<32x32xf32>
    %70 = arith.subf %66, %69 : vector<32x32xf32>
    %71 = math.exp %70 : vector<32x32xf32>
    %cst_24 = arith.constant dense<0.000000e+00> : vector<32xf32>
    %72 = vector.multi_reduction <add>, %71, %cst_24 [1] : vector<32x32xf32> to vector<32xf32>
    %73 = vector.shape_cast %72 : vector<32xf32> to vector<32x1xf32>
    %74 = arith.truncf %71 : vector<32x32xf32> to vector<32x32xbf16>
    %75 = vector.extract_strided_slice %34 {offsets = [0, 0], sizes = [32, 16], strides = [1, 1]} : vector<32x64xbf16> to vector<32x16xbf16>
    %cst_25 = arith.constant dense<0.000000e+00> : vector<32x16xf32>
    %76 = tpu.matmul %74, %75, %cst_25 {dimension_numbers = #tpu.dot_dimension_numbers<[1], [0], [0], [1], [0, 0, 1, 1], [], []>} : vector<32x32xbf16>, vector<32x16xbf16>, vector<32x16xf32> -> vector<32x16xf32>
    %77 = tpu.reciprocal %73 {approx = true} : vector<32x1xf32> -> vector<32x1xf32>
    %78 = vector.broadcast %77 : vector<32x1xf32> to vector<32x16xf32>
    %79 = arith.mulf %76, %78 : vector<32x16xf32>
    %80 = vector.extract_strided_slice %49 {offsets = [0, 16], sizes = [32, 16], strides = [1, 1]} : vector<32x64xbf16> to vector<32x16xbf16>
    %81 = vector.extract_strided_slice %61 {offsets = [0, 16], sizes = [32, 16], strides = [1, 1]} : vector<32x64xbf16> to vector<32x16xbf16>
    %cst_26 = arith.constant dense<0.000000e+00> : vector<32x32xf32>
    %82 = tpu.matmul %80, %81, %cst_26 {dimension_numbers = #tpu.dot_dimension_numbers<[1], [1], [0], [0], [0, 0, 1, 0], [], []>} : vector<32x16xbf16>, vector<32x16xbf16>, vector<32x32xf32> -> vector<32x32xf32>
    %83 = arith.addf %82, %62 : vector<32x32xf32>
    %cst_27 = arith.constant dense<0xFF800000> : vector<32xf32>
    %84 = vector.multi_reduction <maximumf>, %83, %cst_27 [1] : vector<32x32xf32> to vector<32xf32>
    %85 = vector.shape_cast %84 : vector<32xf32> to vector<32x1xf32>
    %86 = vector.broadcast %85 : vector<32x1xf32> to vector<32x32xf32>
    %87 = arith.subf %83, %86 : vector<32x32xf32>
    %88 = math.exp %87 : vector<32x32xf32>
    %cst_28 = arith.constant dense<0.000000e+00> : vector<32xf32>
    %89 = vector.multi_reduction <add>, %88, %cst_28 [1] : vector<32x32xf32> to vector<32xf32>
    %90 = vector.shape_cast %89 : vector<32xf32> to vector<32x1xf32>
    %91 = arith.truncf %88 : vector<32x32xf32> to vector<32x32xbf16>
    %92 = vector.extract_strided_slice %34 {offsets = [0, 16], sizes = [32, 16], strides = [1, 1]} : vector<32x64xbf16> to vector<32x16xbf16>
    %cst_29 = arith.constant dense<0.000000e+00> : vector<32x16xf32>
    %93 = tpu.matmul %91, %92, %cst_29 {dimension_numbers = #tpu.dot_dimension_numbers<[1], [0], [0], [1], [0, 0, 1, 1], [], []>} : vector<32x32xbf16>, vector<32x16xbf16>, vector<32x16xf32> -> vector<32x16xf32>
    %94 = tpu.reciprocal %90 {approx = true} : vector<32x1xf32> -> vector<32x1xf32>
    %95 = vector.broadcast %94 : vector<32x1xf32> to vector<32x16xf32>
    %96 = arith.mulf %93, %95 : vector<32x16xf32>
    %97 = vector.extract_strided_slice %49 {offsets = [0, 32], sizes = [32, 16], strides = [1, 1]} : vector<32x64xbf16> to vector<32x16xbf16>
    %98 = vector.extract_strided_slice %61 {offsets = [0, 32], sizes = [32, 16], strides = [1, 1]} : vector<32x64xbf16> to vector<32x16xbf16>
    %cst_30 = arith.constant dense<0.000000e+00> : vector<32x32xf32>
    %99 = tpu.matmul %97, %98, %cst_30 {dimension_numbers = #tpu.dot_dimension_numbers<[1], [1], [0], [0], [0, 0, 1, 0], [], []>} : vector<32x16xbf16>, vector<32x16xbf16>, vector<32x32xf32> -> vector<32x32xf32>
    %100 = arith.addf %99, %62 : vector<32x32xf32>
    %cst_31 = arith.constant dense<0xFF800000> : vector<32xf32>
    %101 = vector.multi_reduction <maximumf>, %100, %cst_31 [1] : vector<32x32xf32> to vector<32xf32>
    %102 = vector.shape_cast %101 : vector<32xf32> to vector<32x1xf32>
    %103 = vector.broadcast %102 : vector<32x1xf32> to vector<32x32xf32>
    %104 = arith.subf %100, %103 : vector<32x32xf32>
    %105 = math.exp %104 : vector<32x32xf32>
    %cst_32 = arith.constant dense<0.000000e+00> : vector<32xf32>
    %106 = vector.multi_reduction <add>, %105, %cst_32 [1] : vector<32x32xf32> to vector<32xf32>
    %107 = vector.shape_cast %106 : vector<32xf32> to vector<32x1xf32>
    %108 = arith.truncf %105 : vector<32x32xf32> to vector<32x32xbf16>
    %109 = vector.extract_strided_slice %34 {offsets = [0, 32], sizes = [32, 16], strides = [1, 1]} : vector<32x64xbf16> to vector<32x16xbf16>
    %cst_33 = arith.constant dense<0.000000e+00> : vector<32x16xf32>
    %110 = tpu.matmul %108, %109, %cst_33 {dimension_numbers = #tpu.dot_dimension_numbers<[1], [0], [0], [1], [0, 0, 1, 1], [], []>} : vector<32x32xbf16>, vector<32x16xbf16>, vector<32x16xf32> -> vector<32x16xf32>
    %111 = tpu.reciprocal %107 {approx = true} : vector<32x1xf32> -> vector<32x1xf32>
    %112 = vector.broadcast %111 : vector<32x1xf32> to vector<32x16xf32>
    %113 = arith.mulf %110, %112 : vector<32x16xf32>
    %114 = vector.extract_strided_slice %49 {offsets = [0, 48], sizes = [32, 16], strides = [1, 1]} : vector<32x64xbf16> to vector<32x16xbf16>
    %115 = vector.extract_strided_slice %61 {offsets = [0, 48], sizes = [32, 16], strides = [1, 1]} : vector<32x64xbf16> to vector<32x16xbf16>
    %cst_34 = arith.constant dense<0.000000e+00> : vector<32x32xf32>
    %116 = tpu.matmul %114, %115, %cst_34 {dimension_numbers = #tpu.dot_dimension_numbers<[1], [1], [0], [0], [0, 0, 1, 0], [], []>} : vector<32x16xbf16>, vector<32x16xbf16>, vector<32x32xf32> -> vector<32x32xf32>
    %117 = arith.addf %116, %62 : vector<32x32xf32>
    %cst_35 = arith.constant dense<0xFF800000> : vector<32xf32>
    %118 = vector.multi_reduction <maximumf>, %117, %cst_35 [1] : vector<32x32xf32> to vector<32xf32>
    %119 = vector.shape_cast %118 : vector<32xf32> to vector<32x1xf32>
    %120 = vector.broadcast %119 : vector<32x1xf32> to vector<32x32xf32>
    %121 = arith.subf %117, %120 : vector<32x32xf32>
    %122 = math.exp %121 : vector<32x32xf32>
    %cst_36 = arith.constant dense<0.000000e+00> : vector<32xf32>
    %123 = vector.multi_reduction <add>, %122, %cst_36 [1] : vector<32x32xf32> to vector<32xf32>
    %124 = vector.shape_cast %123 : vector<32xf32> to vector<32x1xf32>
    %125 = arith.truncf %122 : vector<32x32xf32> to vector<32x32xbf16>
    %126 = vector.extract_strided_slice %34 {offsets = [0, 48], sizes = [32, 16], strides = [1, 1]} : vector<32x64xbf16> to vector<32x16xbf16>
    %cst_37 = arith.constant dense<0.000000e+00> : vector<32x16xf32>
    %127 = tpu.matmul %125, %126, %cst_37 {dimension_numbers = #tpu.dot_dimension_numbers<[1], [0], [0], [1], [0, 0, 1, 1], [], []>} : vector<32x32xbf16>, vector<32x16xbf16>, vector<32x16xf32> -> vector<32x16xf32>
    %128 = tpu.reciprocal %124 {approx = true} : vector<32x1xf32> -> vector<32x1xf32>
    %129 = vector.broadcast %128 : vector<32x1xf32> to vector<32x16xf32>
    %130 = arith.mulf %127, %129 : vector<32x16xf32>
    %131 = tpu.concatenate %79, %96, %113, %130 in 1 : vector<32x16xf32>, vector<32x16xf32>, vector<32x16xf32>, vector<32x16xf32> -> vector<32x64xf32>
    %132 = arith.truncf %131 : vector<32x64xf32> to vector<32x64xbf16>
    %c0_38 = arith.constant 0 : index
    %c0_39 = arith.constant 0 : index
    %133 = vector.load %arg6[%c0_38, %c0_39] : memref<64x64xbf16, #tpu.memory_space<vmem>>, vector<64x64xbf16>
    %cst_40 = arith.constant dense<0.000000e+00> : vector<32x64xf32>
    %134 = tpu.matmul %132, %133, %cst_40 {dimension_numbers = #tpu.dot_dimension_numbers<[1], [0], [0], [1], [0, 0, 1, 1], [], []>} : vector<32x64xbf16>, vector<64x64xbf16>, vector<32x64xf32> -> vector<32x64xf32>
    %c0_41 = arith.constant 0 : index
    %c0_42 = arith.constant 0 : index
    %135 = vector.load %arg1[%c0_41, %c0_42] : memref<32x64xf32, #tpu.memory_space<vmem>>, vector<32x64xf32>
    %136 = arith.addf %135, %134 : vector<32x64xf32>
    %c0_43 = arith.constant 0 : index
    %c0_44 = arith.constant 0 : index
    %137 = vector.load %arg7[%c0_43, %c0_44] : memref<1x64xf32, #tpu.memory_space<vmem>>, vector<1x64xf32>
    %138 = vector.broadcast %137 : vector<1x64xf32> to vector<32x64xf32>
    %139 = arith.addf %136, %138 : vector<32x64xf32>
    %c0_45 = arith.constant 0 : index
    %c0_46 = arith.constant 0 : index
    %140 = vector.load %arg12[%c0_45, %c0_46] : memref<1x64xf32, #tpu.memory_space<vmem>>, vector<1x64xf32>
    %c0_47 = arith.constant 0 : index
    %c0_48 = arith.constant 0 : index
    %141 = vector.load %arg13[%c0_47, %c0_48] : memref<1x64xf32, #tpu.memory_space<vmem>>, vector<1x64xf32>
    %cst_49 = arith.constant dense<0.000000e+00> : vector<32xf32>
    %142 = vector.multi_reduction <add>, %139, %cst_49 [1] : vector<32x64xf32> to vector<32xf32>
    %143 = vector.shape_cast %142 : vector<32xf32> to vector<32x1xf32>
    %cst_50 = arith.constant 6.400000e+01 : f32
    %144 = vector.broadcast %cst_50 : f32 to vector<32x1xf32>
    %145 = arith.divf %143, %144 : vector<32x1xf32>
    %146 = vector.broadcast %145 : vector<32x1xf32> to vector<32x64xf32>
    %147 = arith.subf %139, %146 : vector<32x64xf32>
    %148 = arith.mulf %147, %147 : vector<32x64xf32>
    %cst_51 = arith.constant dense<0.000000e+00> : vector<32xf32>
    %149 = vector.multi_reduction <add>, %148, %cst_51 [1] : vector<32x64xf32> to vector<32xf32>
    %150 = vector.shape_cast %149 : vector<32xf32> to vector<32x1xf32>
    %cst_52 = arith.constant 6.400000e+01 : f32
    %151 = vector.broadcast %cst_52 : f32 to vector<32x1xf32>
    %152 = arith.divf %150, %151 : vector<32x1xf32>
    %153 = vector.broadcast %145 : vector<32x1xf32> to vector<32x64xf32>
    %154 = arith.subf %139, %153 : vector<32x64xf32>
    %cst_53 = arith.constant 9.99999974E-6 : f32
    %155 = vector.broadcast %cst_53 : f32 to vector<32x1xf32>
    %156 = arith.addf %152, %155 : vector<32x1xf32>
    %157 = math.rsqrt %156 : vector<32x1xf32>
    %158 = vector.broadcast %157 : vector<32x1xf32> to vector<32x64xf32>
    %159 = arith.mulf %154, %158 : vector<32x64xf32>
    %160 = vector.broadcast %140 : vector<1x64xf32> to vector<32x64xf32>
    %161 = arith.mulf %159, %160 : vector<32x64xf32>
    %162 = vector.broadcast %141 : vector<1x64xf32> to vector<32x64xf32>
    %163 = arith.addf %161, %162 : vector<32x64xf32>
    %164 = arith.truncf %163 : vector<32x64xf32> to vector<32x64xbf16>
    %c0_54 = arith.constant 0 : index
    %c0_55 = arith.constant 0 : index
    %165 = vector.load %arg14[%c0_54, %c0_55] : memref<64x256xbf16, #tpu.memory_space<vmem>>, vector<64x256xbf16>
    %cst_56 = arith.constant dense<0.000000e+00> : vector<32x256xf32>
    %166 = tpu.matmul %164, %165, %cst_56 {dimension_numbers = #tpu.dot_dimension_numbers<[1], [0], [0], [1], [0, 0, 1, 1], [], []>} : vector<32x64xbf16>, vector<64x256xbf16>, vector<32x256xf32> -> vector<32x256xf32>
    %c0_57 = arith.constant 0 : index
    %c0_58 = arith.constant 0 : index
    %167 = vector.load %arg15[%c0_57, %c0_58] : memref<1x256xf32, #tpu.memory_space<vmem>>, vector<1x256xf32>
    %168 = vector.broadcast %167 : vector<1x256xf32> to vector<32x256xf32>
    %169 = arith.addf %166, %168 : vector<32x256xf32>
    %170 = arith.negf %169 : vector<32x256xf32>
    %171 = math.exp %170 : vector<32x256xf32>
    %cst_59 = arith.constant 1.000000e+00 : f32
    %172 = vector.broadcast %cst_59 : f32 to vector<32x256xf32>
    %173 = arith.addf %172, %171 : vector<32x256xf32>
    %174 = arith.divf %172, %173 : vector<32x256xf32>
    %175 = arith.mulf %169, %174 : vector<32x256xf32>
    %176 = arith.truncf %175 : vector<32x256xf32> to vector<32x256xbf16>
    %c0_60 = arith.constant 0 : index
    %c0_61 = arith.constant 0 : index
    %177 = vector.load %arg16[%c0_60, %c0_61] : memref<256x64xbf16, #tpu.memory_space<vmem>>, vector<256x64xbf16>
    %cst_62 = arith.constant dense<0.000000e+00> : vector<32x64xf32>
    %178 = tpu.matmul %176, %177, %cst_62 {dimension_numbers = #tpu.dot_dimension_numbers<[1], [0], [0], [1], [0, 0, 1, 1], [], []>} : vector<32x256xbf16>, vector<256x64xbf16>, vector<32x64xf32> -> vector<32x64xf32>
    %c0_63 = arith.constant 0 : index
    %c0_64 = arith.constant 0 : index
    %179 = vector.load %arg17[%c0_63, %c0_64] : memref<1x64xf32, #tpu.memory_space<vmem>>, vector<1x64xf32>
    %180 = vector.broadcast %179 : vector<1x64xf32> to vector<32x64xf32>
    %181 = arith.addf %178, %180 : vector<32x64xf32>
    %182 = arith.addf %139, %181 : vector<32x64xf32>
    %c0_65 = arith.constant 0 : index
    %c0_66 = arith.constant 0 : index
    %183 = vector.load %arg18[%c0_65, %c0_66] : memref<32x64xf32, #tpu.memory_space<vmem>>, vector<32x64xf32>
    tpu.vector_store %arg18[%c0_65, %c0_66], %182 {strides = array<i32>} : memref<32x64xf32, #tpu.memory_space<vmem>>, vector<32x64xf32>,
    return
  }
  func.func @transform_0(%arg0: i32) -> (i32, i32) {
    %c0_i32 = arith.constant 0 : i32
    %c0_i32_0 = arith.constant 0 : i32
    %c0_i32_1 = arith.constant 0 : i32
    return %c0_i32, %c0_i32_0 : i32, i32
  }
  func.func @transform_1(%arg0: i32) -> (i32, i32) {
    %c0_i32 = arith.constant 0 : i32
    %c0_i32_0 = arith.constant 0 : i32
    %c0_i32_1 = arith.constant 0 : i32
    return %c0_i32, %c0_i32_0 : i32, i32
  }
  func.func @transform_2(%arg0: i32) -> (i32, i32) {
    %c0_i32 = arith.constant 0 : i32
    %c0_i32_0 = arith.constant 0 : i32
    %c0_i32_1 = arith.constant 0 : i32
    return %c0_i32, %c0_i32_0 : i32, i32
  }
  func.func @transform_3(%arg0: i32) -> (i32, i32) {
    %c0_i32 = arith.constant 0 : i32
    %c0_i32_0 = arith.constant 0 : i32
    %c0_i32_1 = arith.constant 0 : i32
    return %c0_i32, %c0_i32_0 : i32, i32
  }
  func.func @transform_4(%arg0: i32) -> (i32, i32) {
    %c0_i32 = arith.constant 0 : i32
    %c0_i32_0 = arith.constant 0 : i32
    %c0_i32_1 = arith.constant 0 : i32
    return %c0_i32, %c0_i32_0 : i32, i32
  }
  func.func @transform_5(%arg0: i32) -> (i32, i32) {
    %c0_i32 = arith.constant 0 : i32
    %c0_i32_0 = arith.constant 0 : i32
    %c0_i32_1 = arith.constant 0 : i32
    return %c0_i32, %c0_i32_0 : i32, i32
  }
  func.func @transform_6(%arg0: i32) -> (i32, i32) {
    %c0_i32 = arith.constant 0 : i32
    %c0_i32_0 = arith.constant 0 : i32
    %c0_i32_1 = arith.constant 0 : i32
    return %c0_i32, %c0_i32_0 : i32, i32
  }
  func.func @transform_7(%arg0: i32) -> (i32, i32) {
    %c0_i32 = arith.constant 0 : i32
    %c0_i32_0 = arith.constant 0 : i32
    %c0_i32_1 = arith.constant 0 : i32
    return %c0_i32, %c0_i32_0 : i32, i32
  }
  func.func @transform_8(%arg0: i32) -> (i32, i32) {
    %c0_i32 = arith.constant 0 : i32
    %c0_i32_0 = arith.constant 0 : i32
    %c0_i32_1 = arith.constant 0 : i32
    return %c0_i32, %c0_i32_0 : i32, i32
  }
  func.func @transform_9(%arg0: i32) -> (i32, i32) {
    %c0_i32 = arith.constant 0 : i32
    %c0_i32_0 = arith.constant 0 : i32
    %c0_i32_1 = arith.constant 0 : i32
    return %c0_i32, %c0_i32_0 : i32, i32
  }
  func.func @transform_10(%arg0: i32) -> (i32, i32) {
    %c0_i32 = arith.constant 0 : i32
    %c0_i32_0 = arith.constant 0 : i32
    %c0_i32_1 = arith.constant 0 : i32
    return %c0_i32, %c0_i32_0 : i32, i32
  }
  func.func @transform_11(%arg0: i32) -> (i32, i32) {
    %c0_i32 = arith.constant 0 : i32
    %c0_i32_0 = arith.constant 0 : i32
    %c0_i32_1 = arith.constant 0 : i32
    return %c0_i32, %c0_i32_0 : i32, i32
  }
  func.func @transform_12(%arg0: i32) -> (i32, i32) {
    %c0_i32 = arith.constant 0 : i32
    %c0_i32_0 = arith.constant 0 : i32
    %c0_i32_1 = arith.constant 0 : i32
    return %c0_i32, %c0_i32_0 : i32, i32
  }
  func.func @transform_13(%arg0: i32) -> (i32, i32) {
    %c0_i32 = arith.constant 0 : i32
    %c0_i32_0 = arith.constant 0 : i32
    %c0_i32_1 = arith.constant 0 : i32
    return %c0_i32, %c0_i32_0 : i32, i32
  }
  func.func @transform_14(%arg0: i32) -> (i32, i32) {
    %c0_i32 = arith.constant 0 : i32
    %c0_i32_0 = arith.constant 0 : i32
    %c0_i32_1 = arith.constant 0 : i32
    return %c0_i32, %c0_i32_0 : i32, i32
  }
  func.func @transform_15(%arg0: i32) -> (i32, i32) {
    %c0_i32 = arith.constant 0 : i32
    %c0_i32_0 = arith.constant 0 : i32
    %c0_i32_1 = arith.constant 0 : i32
    return %c0_i32, %c0_i32_0 : i32, i32
  }
  func.func @transform_16(%arg0: i32) -> (i32, i32) {
    %c0_i32 = arith.constant 0 : i32
    %c0_i32_0 = arith.constant 0 : i32
    %c0_i32_1 = arith.constant 0 : i32
    return %c0_i32, %c0_i32_0 : i32, i32
  }
  func.func @transform_17(%arg0: i32) -> (i32, i32) {
    %c0_i32 = arith.constant 0 : i32
    %c0_i32_0 = arith.constant 0 : i32
    %c0_i32_1 = arith.constant 0 : i32
    return %c0_i32, %c0_i32_0 : i32, i32
  }
}

</mosaic_0001>

<llo_original>
// kernel: transformer_block_pallas.1
$region0: #{transformer_block_pallas.1}
  #allocation0 [shape = 'u32[]', space=smem, size = 0x4, offset = 0x4, fixed_abs, tag = 'smem constant byte address 0x4 - core index']
  #allocation1 [shape = 'u32[72,128]{1,0:T(1,128)}', space=vmem, size = 0x9000, scoped, tag = 'internal scratch']
  %s0 = inlined_call_operand.vmem [shape: f32[32,64], index: 0, kind: input, shape index: {}]
  %s1 = inlined_call_operand.hbm [shape: f32[1,64], index: 1, kind: input, shape index: {}]
  %s2 = inlined_call_operand.hbm [shape: f32[1,64], index: 2, kind: input, shape index: {}]
  %s3 = inlined_call_operand.vmem [shape: bf16[64,192], index: 3, kind: input, shape index: {}]
  %s4 = inlined_call_operand.vmem [shape: f32[1,192], index: 4, kind: input, shape index: {}]
  %s5 = inlined_call_operand.vmem [shape: bf16[64,64], index: 5, kind: input, shape index: {}]
  %s6 = inlined_call_operand.vmem [shape: f32[1,64], index: 6, kind: input, shape index: {}]
  %s7 = inlined_call_operand.hbm [shape: f32[32,64], index: 7, kind: input, shape index: {}]
  %s8 = inlined_call_operand.hbm [shape: f32[32,64], index: 8, kind: input, shape index: {}]
  %s9 = inlined_call_operand.hbm [shape: f32[32,64], index: 9, kind: input, shape index: {}]
  %s10 = inlined_call_operand.hbm [shape: f32[32,32], index: 10, kind: input, shape index: {}]
  %s11 = inlined_call_operand.vmem [shape: f32[1,64], index: 11, kind: input, shape index: {}]
  %s12 = inlined_call_operand.vmem [shape: f32[1,64], index: 12, kind: input, shape index: {}]
  %s13 = inlined_call_operand.vmem [shape: bf16[64,256], index: 13, kind: input, shape index: {}]
  %s14 = inlined_call_operand.vmem [shape: f32[1,256], index: 14, kind: input, shape index: {}]
  %s15 = inlined_call_operand.vmem [shape: bf16[256,64], index: 15, kind: input, shape index: {}]
  %s16 = inlined_call_operand.vmem [shape: f32[1,64], index: 16, kind: input, shape index: {}]
  %s17 = inlined_call_operand.hbm [shape: f32[32,64], index: 17, kind: output, shape index: {}]
  %s18 = sld [smem:[#allocation0]]
  $region102: #{transformer_block_pallas.1} parent=0
    _
  %s20 = ssub.s32 1, %s18
  %s21 = scalar_select 0, %s20, %s18
  $region1: #{transformer_block_pallas.1} parent=0
    #allocation2 [shape = 'u8[512]{0}', space=vmem, size = 0x400, scoped, tag = 'input window, operand 1, single buffered']
    #allocation3 [shape = 's32[1]{0}', space=sflag, size = 0x4, scoped, tag = 'scoped memory for transformer_block_pallas.1']
    #allocation4 [shape = 's32[1]{0}', space=sflag, size = 0x4, scoped, tag = 'scoped memory for transformer_block_pallas.1']
    #allocation5 [shape = 'u8[512]{0}', space=vmem, size = 0x400, scoped, tag = 'input window, operand 2, single buffered']
    #allocation6 [shape = 's32[1]{0}', space=sflag, size = 0x4, scoped, tag = 'scoped memory for transformer_block_pallas.1']
    #allocation7 [shape = 'u8[16384]{0}', space=vmem, size = 0x4000, scoped, tag = 'input window, operand 7, single buffered']
    #allocation8 [shape = 'u8[16384]{0}', space=vmem, size = 0x4000, scoped, tag = 'input window, operand 8, single buffered']
    #allocation9 [shape = 's32[1]{0}', space=sflag, size = 0x4, scoped, tag = 'scoped memory for transformer_block_pallas.1']
    #allocation10 [shape = 'u8[16384]{0}', space=vmem, size = 0x4000, scoped, tag = 'input window, operand 9, single buffered']
    #allocation11 [shape = 'u8[16384]{0}', space=vmem, size = 0x4000, scoped, tag = 'input window, operand 10, single buffered']
    #allocation12 [shape = 's32[1]{0}', space=sflag, size = 0x4, scoped, tag = 'scoped memory for transformer_block_pallas.1']
    #allocation13 [shape = 'u8[16384]{0}', space=vmem, size = 0x4000, scoped, tag = 'output window, operand 0, single buffered']
    %22 = vsyncpa [#allocation3], 0
    %23 = vsyncpa [#allocation6], 0
    %24 = vsyncpa [#allocation9], 0
    %25 = vsyncpa [#allocation12], 0
    %26 = vsyncpa [#allocation4], 0
    // Predicated region
    $region2: #{transformer_block_pallas.1} parent=1 // pred_check
      _
    $region3: #{transformer_block_pallas.1} parent=1 // pred_check_branch
      %28 = sbr.rel (0) target = $region5
    $region4: #{transformer_block_pallas.1} parent=1 // pred_region
      _
    $region5: #{transformer_block_pallas.1} parent=1 // pred_fallthru
      _
    // Predicated region
    $region6: #{transformer_block_pallas.1} parent=1 // pred_check
      _
    $region7: #{transformer_block_pallas.1} parent=1 // pred_check_branch
      %30 = sbr.rel (0) target = $region9
    $region8: #{transformer_block_pallas.1} parent=1 // pred_region
      %32 = vsyncadd [#allocation3], 0
      %s34 = sshll.u32 %s1, 4
      %s35 = int_to_ptr.hbm [resolvable:$true] %s34
      %s36 = sshll.u32 [#allocation2], 4
      %s37 = int_to_ptr.vmem [resolvable:$true] %s36
      %39 = dma.hbm_to_vmem [thread:$0]  %s35, 16, %s37, [#allocation3]
    $region9: #{transformer_block_pallas.1} parent=1 // pred_fallthru
      _
    // Predicated region
    $region10: #{transformer_block_pallas.1} parent=1 // pred_check
      _
    $region11: #{transformer_block_pallas.1} parent=1 // pred_check_branch
      %41 = sbr.rel (0) target = $region13
    $region12: #{transformer_block_pallas.1} parent=1 // pred_region
      %43 = vsyncadd [#allocation6], 0
      %s45 = sshll.u32 %s2, 4
      %s46 = int_to_ptr.hbm [resolvable:$true] %s45
      %s47 = sshll.u32 [#allocation5], 4
      %s48 = int_to_ptr.vmem [resolvable:$true] %s47
      %50 = dma.hbm_to_vmem [thread:$0]  %s46, 16, %s48, [#allocation6]
    $region13: #{transformer_block_pallas.1} parent=1 // pred_fallthru
      _
    // Predicated region
    $region14: #{transformer_block_pallas.1} parent=1 // pred_check
      _
    $region15: #{transformer_block_pallas.1} parent=1 // pred_check_branch
      %52 = sbr.rel (0) target = $region17
    $region16: #{transformer_block_pallas.1} parent=1 // pred_region
      _
    $region17: #{transformer_block_pallas.1} parent=1 // pred_fallthru
      _
    // Predicated region
    $region18: #{transformer_block_pallas.1} parent=1 // pred_check
      _
    $region19: #{transformer_block_pallas.1} parent=1 // pred_check_branch
      %54 = sbr.rel (0) target = $region21
    $region20: #{transformer_block_pallas.1} parent=1 // pred_region
      _
    $region21: #{transformer_block_pallas.1} parent=1 // pred_fallthru
      _
    // Predicated region
    $region22: #{transformer_block_pallas.1} parent=1 // pred_check
      _
    $region23: #{transformer_block_pallas.1} parent=1 // pred_check_branch
      %56 = sbr.rel (0) target = $region25
    $region24: #{transformer_block_pallas.1} parent=1 // pred_region
      _
    $region25: #{transformer_block_pallas.1} parent=1 // pred_fallthru
      _
    // Predicated region
    $region26: #{transformer_block_pallas.1} parent=1 // pred_check
      _
    $region27: #{transformer_block_pallas.1} parent=1 // pred_check_branch
      %58 = sbr.rel (0) target = $region29
    $region28: #{transformer_block_pallas.1} parent=1 // pred_region
      _
    $region29: #{transformer_block_pallas.1} parent=1 // pred_fallthru
      _
    // Predicated region
    $region30: #{transformer_block_pallas.1} parent=1 // pred_check
      _
    $region31: #{transformer_block_pallas.1} parent=1 // pred_check_branch
      %60 = sbr.rel (0) target = $region33
    $region32: #{transformer_block_pallas.1} parent=1 // pred_region
      %62 = vsyncadd [#allocation6], 0
      %s63 = sshll.u32 %s7, 4
      %s64 = int_to_ptr.hbm [resolvable:$true] %s63
      %s65 = sshll.u32 [#allocation7], 4
      %s66 = int_to_ptr.vmem [resolvable:$true] %s65
      %71 = dma.hbm_to_vmem [thread:$0]  %s64, 512, %s66, [#allocation6], 128, 128, 8
    $region33: #{transformer_block_pallas.1} parent=1 // pred_fallthru
      _
    // Predicated region
    $region34: #{transformer_block_pallas.1} parent=1 // pred_check
      _
    $region35: #{transformer_block_pallas.1} parent=1 // pred_check_branch
      %73 = sbr.rel (0) target = $region37
    $region36: #{transformer_block_pallas.1} parent=1 // pred_region
      %75 = vsyncadd [#allocation9], 0
      %s76 = sshll.u32 %s8, 4
      %s77 = int_to_ptr.hbm [resolvable:$true] %s76
      %s78 = sshll.u32 [#allocation8], 4
      %s79 = int_to_ptr.vmem [resolvable:$true] %s78
      %84 = dma.hbm_to_vmem [thread:$0]  %s77, 512, %s79, [#allocation9], 128, 128, 8
    $region37: #{transformer_block_pallas.1} parent=1 // pred_fallthru
      _
    // Predicated region
    $region38: #{transformer_block_pallas.1} parent=1 // pred_check
      _
    $region39: #{transformer_block_pallas.1} parent=1 // pred_check_branch
      %86 = sbr.rel (0) target = $region41
    $region40: #{transformer_block_pallas.1} parent=1 // pred_region
      %88 = vsyncadd [#allocation9], 0
      %s89 = sshll.u32 %s9, 4
      %s90 = int_to_ptr.hbm [resolvable:$true] %s89
      %s91 = sshll.u32 [#allocation10], 4
      %s92 = int_to_ptr.vmem [resolvable:$true] %s91
      %97 = dma.hbm_to_vmem [thread:$0]  %s90, 512, %s92, [#allocation9], 128, 128, 8
    $region41: #{transformer_block_pallas.1} parent=1 // pred_fallthru
      _
    // Predicated region
    $region42: #{transformer_block_pallas.1} parent=1 // pred_check
      _
    $region43: #{transformer_block_pallas.1} parent=1 // pred_check_branch
      %99 = sbr.rel (0) target = $region45
    $region44: #{transformer_block_pallas.1} parent=1 // pred_region
      %101 = vsyncadd [#allocation12], 0
      %s102 = sshll.u32 %s10, 4
      %s103 = int_to_ptr.hbm [resolvable:$true] %s102
      %s104 = sshll.u32 [#allocation11], 4
      %s105 = int_to_ptr.vmem [resolvable:$true] %s104
      %110 = dma.hbm_to_vmem [thread:$0]  %s103, 512, %s105, [#allocation12], 128, 128, 8
    $region45: #{transformer_block_pallas.1} parent=1 // pred_fallthru
      _
    // Predicated region
    $region46: #{transformer_block_pallas.1} parent=1 // pred_check
      _
    $region47: #{transformer_block_pallas.1} parent=1 // pred_check_branch
      %112 = sbr.rel (0) target = $region49
    $region48: #{transformer_block_pallas.1} parent=1 // pred_region
      _
    $region49: #{transformer_block_pallas.1} parent=1 // pred_fallthru
      _
    // Predicated region
    $region50: #{transformer_block_pallas.1} parent=1 // pred_check
      _
    $region51: #{transformer_block_pallas.1} parent=1 // pred_check_branch
      %114 = sbr.rel (0) target = $region53
    $region52: #{transformer_block_pallas.1} parent=1 // pred_region
      _
    $region53: #{transformer_block_pallas.1} parent=1 // pred_fallthru
      _
    // Predicated region
    $region54: #{transformer_block_pallas.1} parent=1 // pred_check
      _
    $region55: #{transformer_block_pallas.1} parent=1 // pred_check_branch
      %116 = sbr.rel (0) target = $region57
    $region56: #{transformer_block_pallas.1} parent=1 // pred_region
      _
    $region57: #{transformer_block_pallas.1} parent=1 // pred_fallthru
      _
    // Predicated region
    $region58: #{transformer_block_pallas.1} parent=1 // pred_check
      _
    $region59: #{transformer_block_pallas.1} parent=1 // pred_check_branch
      %118 = sbr.rel (0) target = $region61
    $region60: #{transformer_block_pallas.1} parent=1 // pred_region
      _
    $region61: #{transformer_block_pallas.1} parent=1 // pred_fallthru
      _
    // Predicated region
    $region62: #{transformer_block_pallas.1} parent=1 // pred_check
      _
    $region63: #{transformer_block_pallas.1} parent=1 // pred_check_branch
      %120 = sbr.rel (0) target = $region65
    $region64: #{transformer_block_pallas.1} parent=1 // pred_region
      _
    $region65: #{transformer_block_pallas.1} parent=1 // pred_fallthru
      _
    // Predicated region
    $region66: #{transformer_block_pallas.1} parent=1 // pred_check
      _
    $region67: #{transformer_block_pallas.1} parent=1 // pred_check_branch
      %122 = sbr.rel (0) target = $region69
    $region68: #{transformer_block_pallas.1} parent=1 // pred_region
      _
    $region69: #{transformer_block_pallas.1} parent=1 // pred_fallthru
      _
    // Predicated region
    $region70: #{transformer_block_pallas.1} parent=1 // pred_check
      _
    $region71: #{transformer_block_pallas.1} parent=1 // pred_check_branch
      %124 = sbr.rel (0) target = $region73
    $region72: #{transformer_block_pallas.1} parent=1 // pred_region
      %126 = dma.done [#allocation3], 16
    $region73: #{transformer_block_pallas.1} parent=1 // pred_fallthru
      _
    // Predicated region
    $region74: #{transformer_block_pallas.1} parent=1 // pred_check
      _
    $region75: #{transformer_block_pallas.1} parent=1 // pred_check_branch
      %128 = sbr.rel (0) target = $region77
    $region76: #{transformer_block_pallas.1} parent=1 // pred_region
      %130 = dma.done [#allocation6], 16
    $region77: #{transformer_block_pallas.1} parent=1 // pred_fallthru
      _
    // Predicated region
    $region78: #{transformer_block_pallas.1} parent=1 // pred_check
      _
    $region79: #{transformer_block_pallas.1} parent=1 // pred_check_branch
      %132 = sbr.rel (0) target = $region81
    $region80: #{transformer_block_pallas.1} parent=1 // pred_region
      %134 = dma.done [#allocation6], 512
    $region81: #{transformer_block_pallas.1} parent=1 // pred_fallthru
      _
    // Predicated region
    $region82: #{transformer_block_pallas.1} parent=1 // pred_check
      _
    $region83: #{transformer_block_pallas.1} parent=1 // pred_check_branch
      %136 = sbr.rel (0) target = $region85
    $region84: #{transformer_block_pallas.1} parent=1 // pred_region
      %138 = dma.done [#allocation9], 512
    $region85: #{transformer_block_pallas.1} parent=1 // pred_fallthru
      _
    // Predicated region
    $region86: #{transformer_block_pallas.1} parent=1 // pred_check
      _
    $region87: #{transformer_block_pallas.1} parent=1 // pred_check_branch
      %140 = sbr.rel (0) target = $region89
    $region88: #{transformer_block_pallas.1} parent=1 // pred_region
      %142 = dma.done [#allocation9], 512
    $region89: #{transformer_block_pallas.1} parent=1 // pred_fallthru
      _
    // Predicated region
    $region90: #{transformer_block_pallas.1} parent=1 // pred_check
      _
    $region91: #{transformer_block_pallas.1} parent=1 // pred_check_branch
      %144 = sbr.rel (0) target = $region93
    $region92: #{transformer_block_pallas.1} parent=1 // pred_region
      %146 = dma.done [#allocation12], 512
    $region93: #{transformer_block_pallas.1} parent=1 // pred_fallthru
      _
    %v148 = vld [vmem:[%s0] sm:$0xff]
    %v149 = vld [vmem:[%s0 + $0x8] sm:$0xff]
    %v150 = vld [vmem:[%s0 + $0x10] sm:$0xff]
    %v151 = vld [vmem:[%s0 + $0x18] sm:$0xff]
    %v152 = vld [vmem:[#allocation2] sm:$0x1]
    %v153 = vld [vmem:[#allocation5] sm:$0x1]
    %vm154 = vcmask 523264
    %v155 = vsel %vm154, %v148, 0.0
    %156 = vadd.xlane.f32.xlu0 %v155
    %v157 = vpop.xlane.xlu0 %156
    %v158 = vsel %vm154, %v149, 0.0
    %159 = vadd.xlane.f32.xlu0 %v158
    %v160 = vpop.xlane.xlu0 %159
    %v161 = vsel %vm154, %v150, 0.0
    %162 = vadd.xlane.f32.xlu0 %v161
    %v163 = vpop.xlane.xlu0 %162
    %v164 = vsel %vm154, %v151, 0.0
    %165 = vadd.xlane.f32.xlu0 %v164
    %v166 = vpop.xlane.xlu0 %165
    %v167 = vrcp.pop 64.0
    %v168 = vmul.f32 64.0, %v167
    %v169 = vsub.f32 1.0, %v168
    %v170 = vmul.f32 %v167, %v169
    %v171 = vadd.f32 %v167, %v170
    %vm172 = vweird.f32 %v167
    %v173 = vsel %vm172, %v167, %v171
    %v174 = vmul.f32 %v157, %v173
    %v175 = vmul.f32 %v160, %v173
    %v176 = vmul.f32 %v163, %v173
    %v177 = vmul.f32 %v166, %v173
    %v178 = vsub.f32 %v148, %v174
    %v179 = vsub.f32 %v149, %v175
    %v180 = vsub.f32 %v150, %v176
    %v181 = vsub.f32 %v151, %v177
    %v182 = vmul.f32 %v178, %v178
    %v183 = vmul.f32 %v179, %v179
    %v184 = vmul.f32 %v180, %v180
    %v185 = vmul.f32 %v181, %v181
    %v186 = vsel %vm154, %v182, 0.0
    %187 = vadd.xlane.f32.xlu0 %v186
    %v188 = vpop.xlane.xlu0 %187
    %v189 = vsel %vm154, %v183, 0.0
    %190 = vadd.xlane.f32.xlu0 %v189
    %v191 = vpop.xlane.xlu0 %190
    %v192 = vsel %vm154, %v184, 0.0
    %193 = vadd.xlane.f32.xlu0 %v192
    %v194 = vpop.xlane.xlu0 %193
    %v195 = vsel %vm154, %v185, 0.0
    %196 = vadd.xlane.f32.xlu0 %v195
    %v197 = vpop.xlane.xlu0 %196
    %v198 = vmul.f32 %v188, %v173
    %v199 = vmul.f32 %v191, %v173
    %v200 = vmul.f32 %v194, %v173
    %v201 = vmul.f32 %v197, %v173
    %v202 = vadd.f32 %v198, 1e-05
    %v203 = vadd.f32 %v199, 1e-05
    %v204 = vadd.f32 %v200, 1e-05
    %v205 = vadd.f32 %v201, 1e-05
    %v206 = vrsqrt.pop %v202
    %v207 = vmul.f32 %v206, %v202
    %v208 = vmul.f32 %v207, %v206
    %v209 = vmul.f32 0.5, %v208
    %v210 = vsub.f32 1.5, %v209
    %v211 = vmul.f32 %v206, %v210
    %vm212 = vweird.f32 %v202
    %vm213 = vweird.f32 %v206
    %vm214 = vmor %vm212, %vm213
    %v215 = vsel %vm214, %v206, %v211
    %v216 = vrsqrt.pop %v203
    %v217 = vmul.f32 %v216, %v203
    %v218 = vmul.f32 %v217, %v216
    %v219 = vmul.f32 0.5, %v218
    %v220 = vsub.f32 1.5, %v219
    %v221 = vmul.f32 %v216, %v220
    %vm222 = vweird.f32 %v203
    %vm223 = vweird.f32 %v216
    %vm224 = vmor %vm222, %vm223
    %v225 = vsel %vm224, %v216, %v221
    %v226 = vrsqrt.pop %v204
    %v227 = vmul.f32 %v226, %v204
    %v228 = vmul.f32 %v227, %v226
    %v229 = vmul.f32 0.5, %v228
    %v230 = vsub.f32 1.5, %v229
    %v231 = vmul.f32 %v226, %v230
    %vm232 = vweird.f32 %v204
    %vm233 = vweird.f32 %v226
    %vm234 = vmor %vm232, %vm233
    %v235 = vsel %vm234, %v226, %v231
    %v236 = vrsqrt.pop %v205
    %v237 = vmul.f32 %v236, %v205
    %v238 = vmul.f32 %v237, %v236
    %v239 = vmul.f32 0.5, %v238
    %v240 = vsub.f32 1.5, %v239
    %v241 = vmul.f32 %v236, %v240
    %vm242 = vweird.f32 %v205
    %vm243 = vweird.f32 %v236
    %vm244 = vmor %vm242, %vm243
    %v245 = vsel %vm244, %v236, %v241
    %v246 = vmul.f32 %v178, %v215
    %v247 = vmul.f32 %v179, %v225
    %v248 = vmul.f32 %v180, %v235
    %v249 = vmul.f32 %v181, %v245
    %v251 = vperm.slane %v152, 0
    %v253 = vmul.f32 %v246, %v251
    %v254 = vmul.f32 %v247, %v251
    %v255 = vmul.f32 %v248, %v251
    %v256 = vmul.f32 %v249, %v251
    %v258 = vperm.slane %v153, 0
    %v260 = vadd.f32 %v253, %v258
    %v261 = vadd.f32 %v254, %v258
    %v262 = vadd.f32 %v255, %v258
    %v263 = vadd.f32 %v256, %v258
    %v264 = vpack.c.bf16 %v261, %v260
    %v265 = vpack.c.bf16 %v263, %v262
    %v266 = vld [vmem:[%s3] sm:$0xff]
    %v267 = vld [vmem:[%s3 + $0x8] sm:$0xff]
    %v268 = vld [vmem:[%s3 + $0x10] sm:$0xff]
    %v269 = vld [vmem:[%s3 + $0x18] sm:$0xff]
    %v270 = vld [vmem:[%s3 + $0x20] sm:$0xff]
    %v271 = vld [vmem:[%s3 + $0x28] sm:$0xff]
    %v272 = vld [vmem:[%s3 + $0x30] sm:$0xff]
    %v273 = vld [vmem:[%s3 + $0x38] sm:$0xff]
    %v274 = vld [vmem:[%s4] sm:$0x3]
    %v276 = vperm.slane %v274, 0
    %v277 = vperm.slane %v274, 1
    %v288 = vunpack.c.l.b16 %v266
    %v289 = vunpack.c.h.b16 %v266
    %v290 = vunpack.c.l.b16 %v267
    %v291 = vunpack.c.h.b16 %v267
    %v292 = vunpack.c.l.b16 %v268
    %v293 = vunpack.c.h.b16 %v268
    %v294 = vunpack.c.l.b16 %v269
    %v295 = vunpack.c.h.b16 %v269
    %v296 = vunpack.c.l.b16 %v270
    %v297 = vunpack.c.h.b16 %v270
    %v298 = vunpack.c.l.b16 %v271
    %v299 = vunpack.c.h.b16 %v271
    %v300 = vunpack.c.l.b16 %v272
    %v301 = vunpack.c.h.b16 %v272
    %v302 = vunpack.c.l.b16 %v273
    %v303 = vunpack.c.h.b16 %v273
    %v304 = vpack.c.b16 %v290, %v288
    %v305 = vpack.c.b16 %v291, %v289
    %v306 = vpack.c.b16 %v294, %v292
    %v307 = vpack.c.b16 %v295, %v293
    %v308 = vpack.c.b16 %v298, %v296
    %v309 = vpack.c.b16 %v299, %v297
    %v310 = vpack.c.b16 %v302, %v300
    %v311 = vpack.c.b16 %v303, %v301
    %v321 = vsel %vm154, %v264, 0
    %v324 = vsel %vm154, %v265, 0
    %326 = vmatpush.bf16.msra.mxu0 0
    %327 = vmatpush.bf16.msra.mxu0 0
    %328 = vmatpush.bf16.msra.mxu0 0
    %329 = vmatpush.bf16.msra.mxu0 0
    %330 = vmatpush.bf16.msra.mxu0 %v310
    %331 = vmatpush.bf16.msra.mxu0 %v308
    %332 = vmatpush.bf16.msra.mxu0 %v306
    %333 = vmatpush.bf16.msra.mxu0 %v304
    %334 = vmatmul.bf16.gmra.mxu0 %v321
    %v335 = vpop.f32.mrf.mxu0
    %v336 = vadd.f32 %v276, %v335
    %v337 = vpop.f32.mrf.mxu0
    %v338 = vadd.f32 %v276, %v337
    %339 = vmatmul.bf16.gmra.mxu0 %v324
    %v340 = vpop.f32.mrf.mxu0
    %v341 = vadd.f32 %v276, %v340
    %v342 = vpop.f32.mrf.mxu0
    %v343 = vadd.f32 %v276, %v342
    %344 = vdwg.mxu0
    %345 = vmatpush.bf16.msra.mxu0 0
    %346 = vmatpush.bf16.msra.mxu0 0
    %347 = vmatpush.bf16.msra.mxu0 0
    %348 = vmatpush.bf16.msra.mxu0 0
    %349 = vmatpush.bf16.msra.mxu0 %v311
    %350 = vmatpush.bf16.msra.mxu0 %v309
    %351 = vmatpush.bf16.msra.mxu0 %v307
    %352 = vmatpush.bf16.msra.mxu0 %v305
    %353 = vmatmul.bf16.gmra.mxu0 %v321
    %v354 = vpop.f32.mrf.mxu0
    %v355 = vadd.f32 %v277, %v354
    %v356 = vpop.f32.mrf.mxu0
    %v357 = vadd.f32 %v277, %v356
    %358 = vmatmul.bf16.gmra.mxu0 %v324
    %v359 = vpop.f32.mrf.mxu0
    %v360 = vadd.f32 %v277, %v359
    %v361 = vpop.f32.mrf.mxu0
    %v362 = vadd.f32 %v277, %v361
    %363 = vdwg.mxu0
    %v364 = vpack.c.bf16 %v355, %v355
    %v365 = vpack.c.bf16 %v357, %v357
    %v366 = vpack.c.bf16 %v360, %v360
    %v367 = vpack.c.bf16 %v362, %v362
    %v368 = vld [vmem:[#allocation7] sm:$0xff]
    %v369 = vld [vmem:[#allocation7 + $0x8] sm:$0xff]
    %v370 = vld [vmem:[#allocation7 + $0x10] sm:$0xff]
    %v371 = vld [vmem:[#allocation7 + $0x18] sm:$0xff]
    %v372 = vld [vmem:[#allocation8] sm:$0xff]
    %v373 = vld [vmem:[#allocation8 + $0x8] sm:$0xff]
    %v374 = vld [vmem:[#allocation8 + $0x10] sm:$0xff]
    %v375 = vld [vmem:[#allocation8 + $0x18] sm:$0xff]
    %v376 = vld [vmem:[#allocation10] sm:$0xff]
    %v377 = vld [vmem:[#allocation10 + $0x8] sm:$0xff]
    %v378 = vld [vmem:[#allocation10 + $0x10] sm:$0xff]
    %v379 = vld [vmem:[#allocation10 + $0x18] sm:$0xff]
    %384 = vrot.lane.b32.xlu0 %v336, 120
    %v385 = vpop.permute.xlu0 %384
    %386 = vrot.lane.b32.xlu0 %v338, 120
    %v387 = vpop.permute.xlu0 %386
    %388 = vrot.lane.b32.xlu0 %v341, 120
    %v389 = vpop.permute.xlu0 %388
    %390 = vrot.lane.b32.xlu0 %v343, 120
    %v391 = vpop.permute.xlu0 %390
    %396 = vrot.lane.b32.xlu0 %v336, 56
    %v397 = vpop.permute.xlu0 %396
    %398 = vrot.lane.b32.xlu0 %v338, 56
    %v399 = vpop.permute.xlu0 %398
    %400 = vrot.lane.b32.xlu0 %v341, 56
    %v401 = vpop.permute.xlu0 %400
    %402 = vrot.lane.b32.xlu0 %v343, 56
    %v403 = vpop.permute.xlu0 %402
    %vm408 = vcmask 457728
    %v409 = vsel %vm408, %v385, %v397
    %v410 = vsel %vm408, %v387, %v399
    %v411 = vsel %vm408, %v389, %v401
    %v412 = vsel %vm408, %v391, %v403
    %413 = vrot.lane.b32.xlu0 %v336, 72
    %v414 = vpop.permute.xlu0 %413
    %415 = vrot.lane.b32.xlu0 %v338, 72
    %v416 = vpop.permute.xlu0 %415
    %417 = vrot.lane.b32.xlu0 %v341, 72
    %v418 = vpop.permute.xlu0 %417
    %419 = vrot.lane.b32.xlu0 %v343, 72
    %v420 = vpop.permute.xlu0 %419
    %425 = vrot.lane.b32.xlu0 %v336, 8
    %v426 = vpop.permute.xlu0 %425
    %427 = vrot.lane.b32.xlu0 %v338, 8
    %v428 = vpop.permute.xlu0 %427
    %429 = vrot.lane.b32.xlu0 %v341, 8
    %v430 = vpop.permute.xlu0 %429
    %431 = vrot.lane.b32.xlu0 %v343, 8
    %v432 = vpop.permute.xlu0 %431
    %vm437 = vcmask 64512
    %v438 = vsel %vm437, %v414, %v426
    %v439 = vsel %vm437, %v416, %v428
    %v440 = vsel %vm437, %v418, %v430
    %v441 = vsel %vm437, %v420, %v432
    %v442 = vmul.f32 %v336, %v368
    %v443 = vmul.f32 %v338, %v369
    %v444 = vmul.f32 %v341, %v370
    %v445 = vmul.f32 %v343, %v371
    %v446 = vmul.f32 %v409, %v372
    %v447 = vmul.f32 %v410, %v373
    %v448 = vmul.f32 %v411, %v374
    %v449 = vmul.f32 %v412, %v375
    %v450 = vadd.f32 %v442, %v446
    %v451 = vadd.f32 %v443, %v447
    %v452 = vadd.f32 %v444, %v448
    %v453 = vadd.f32 %v445, %v449
    %v454 = vmul.f32 %v438, %v376
    %v455 = vmul.f32 %v439, %v377
    %v456 = vmul.f32 %v440, %v378
    %v457 = vmul.f32 %v441, %v379
    %v458 = vadd.f32 %v450, %v454
    %v459 = vadd.f32 %v451, %v455
    %v460 = vadd.f32 %v452, %v456
    %v461 = vadd.f32 %v453, %v457
    %v462 = vpack.c.bf16 %v458, %v458
    %v463 = vpack.c.bf16 %v459, %v459
    %v464 = vpack.c.bf16 %v460, %v460
    %v465 = vpack.c.bf16 %v461, %v461
    %v466 = vsel %vm408, %v397, %v385
    %v467 = vsel %vm408, %v399, %v387
    %v468 = vsel %vm408, %v401, %v389
    %v469 = vsel %vm408, %v403, %v391
    %v470 = vsel %vm437, %v426, %v414
    %v471 = vsel %vm437, %v428, %v416
    %v472 = vsel %vm437, %v430, %v418
    %v473 = vsel %vm437, %v432, %v420
    %478 = vrot.lane.b32.xlu0 %v368, 64
    %v479 = vpop.permute.xlu0 %478
    %480 = vrot.lane.b32.xlu0 %v369, 64
    %v481 = vpop.permute.xlu0 %480
    %482 = vrot.lane.b32.xlu0 %v370, 64
    %v483 = vpop.permute.xlu0 %482
    %484 = vrot.lane.b32.xlu0 %v371, 64
    %v485 = vpop.permute.xlu0 %484
    %v490 = vmul.f32 %v336, %v479
    %v491 = vmul.f32 %v338, %v481
    %v492 = vmul.f32 %v341, %v483
    %v493 = vmul.f32 %v343, %v485
    %v494 = vmul.f32 %v466, %v372
    %v495 = vmul.f32 %v467, %v373
    %v496 = vmul.f32 %v468, %v374
    %v497 = vmul.f32 %v469, %v375
    %502 = vrot.lane.b32.xlu0 %v494, 64
    %v503 = vpop.permute.xlu0 %502
    %504 = vrot.lane.b32.xlu0 %v495, 64
    %v505 = vpop.permute.xlu0 %504
    %506 = vrot.lane.b32.xlu0 %v496, 64
    %v507 = vpop.permute.xlu0 %506
    %508 = vrot.lane.b32.xlu0 %v497, 64
    %v509 = vpop.permute.xlu0 %508
    %v514 = vadd.f32 %v490, %v503
    %v515 = vadd.f32 %v491, %v505
    %v516 = vadd.f32 %v492, %v507
    %v517 = vadd.f32 %v493, %v509
    %v518 = vmul.f32 %v470, %v376
    %v519 = vmul.f32 %v471, %v377
    %v520 = vmul.f32 %v472, %v378
    %v521 = vmul.f32 %v473, %v379
    %526 = vrot.lane.b32.xlu0 %v518, 64
    %v527 = vpop.permute.xlu0 %526
    %528 = vrot.lane.b32.xlu0 %v519, 64
    %v529 = vpop.permute.xlu0 %528
    %530 = vrot.lane.b32.xlu0 %v520, 64
    %v531 = vpop.permute.xlu0 %530
    %532 = vrot.lane.b32.xlu0 %v521, 64
    %v533 = vpop.permute.xlu0 %532
    %v538 = vadd.f32 %v514, %v527
    %v539 = vadd.f32 %v515, %v529
    %v540 = vadd.f32 %v516, %v531
    %v541 = vadd.f32 %v517, %v533
    %v542 = vpack.c.bf16 %v538, %v538
    %v543 = vpack.c.bf16 %v539, %v539
    %v544 = vpack.c.bf16 %v540, %v540
    %v545 = vpack.c.bf16 %v541, %v541
    %v546 = vld [vmem:[#allocation11] sm:$0xff]
    %v547 = vld [vmem:[#allocation11 + $0x8] sm:$0xff]
    %v548 = vld [vmem:[#allocation11 + $0x10] sm:$0xff]
    %v549 = vld [vmem:[#allocation11 + $0x18] sm:$0xff]
    %v554 = vunpack.c.l.b16 %v462
    %v555 = vunpack.c.l.b16 %v463
    %v556 = vunpack.c.l.b16 %v464
    %v557 = vunpack.c.l.b16 %v465
    %v558 = vpack.c.b16 %v555, %v554
    %v559 = vpack.c.b16 %v557, %v556
    %v564 = vunpack.c.l.b16 %v542
    %v565 = vunpack.c.l.b16 %v543
    %v566 = vunpack.c.l.b16 %v544
    %v567 = vunpack.c.l.b16 %v545
    %v568 = vpack.c.b16 %v565, %v564
    %v569 = vpack.c.b16 %v567, %v566
    %570 = vrot.lane.b32.xlu0 %v568, 64
    %v571 = vpop.permute.xlu0 %570
    %572 = vrot.lane.b32.xlu0 %v569, 64
    %v573 = vpop.permute.xlu0 %572
    %vm574 = vcmask 130048
    %v576 = vsel %vm574, %v558, 0
    %v579 = vsel %vm574, %v559, 0
    %v582 = vsel %vm574, %v571, 0
    %v585 = vsel %vm574, %v573, 0
    %587 = vmatpush.bf16.xpose.msra.mxu0 0
    %588 = vmatpush.bf16.xpose.msra.mxu0 0
    %589 = vmatpush.bf16.xpose.msra.mxu0 0
    %590 = vmatpush.bf16.xpose.msra.mxu0 0
    %591 = vmatpush.bf16.xpose.msra.mxu0 0
    %592 = vmatpush.bf16.xpose.msra.mxu0 0
    %593 = vmatpush.bf16.xpose.msra.mxu0 %v585
    %594 = vmatpush.bf16.xpose.msra.mxu0 %v582
    %595 = vmatmul.bf16.gmra.mxu0 %v576
    %v596 = vpop.f32.mrf.mxu0
    %v597 = vadd.f32 %v546, %v596
    %v598 = vpop.f32.mrf.mxu0
    %v599 = vadd.f32 %v547, %v598
    %600 = vmatmul.bf16.gmra.mxu0 %v579
    %v601 = vpop.f32.mrf.mxu0
    %v602 = vadd.f32 %v548, %v601
    %v603 = vpop.f32.mrf.mxu0
    %v604 = vadd.f32 %v549, %v603
    %605 = vdwg.mxu0
    %vm606 = vcmask 261120
    %v607 = vsel %vm606, %v597, -inf
    %608 = vmax.xlane.f32.xlu0 %v607
    %v609 = vpop.xlane.xlu0 %608
    %v610 = vsel %vm606, %v599, -inf
    %611 = vmax.xlane.f32.xlu0 %v610
    %v612 = vpop.xlane.xlu0 %611
    %v613 = vsel %vm606, %v602, -inf
    %614 = vmax.xlane.f32.xlu0 %v613
    %v615 = vpop.xlane.xlu0 %614
    %v616 = vsel %vm606, %v604, -inf
    %617 = vmax.xlane.f32.xlu0 %v616
    %v618 = vpop.xlane.xlu0 %617
    %v619 = vsub.f32 %v597, %v609
    %v620 = vsub.f32 %v599, %v612
    %v621 = vsub.f32 %v602, %v615
    %v622 = vsub.f32 %v604, %v618
    %v623 = vmul.f32 %v619, 1.442695
    %v624 = vpow.pop %v623
    %v625 = vmul.f32 %v620, 1.442695
    %v626 = vpow.pop %v625
    %v627 = vmul.f32 %v621, 1.442695
    %v628 = vpow.pop %v627
    %v629 = vmul.f32 %v622, 1.442695
    %v630 = vpow.pop %v629
    %v631 = vsel %vm606, %v624, 0.0
    %632 = vadd.xlane.f32.xlu0 %v631
    %v633 = vpop.xlane.xlu0 %632
    %v634 = vsel %vm606, %v626, 0.0
    %635 = vadd.xlane.f32.xlu0 %v634
    %v636 = vpop.xlane.xlu0 %635
    %v637 = vsel %vm606, %v628, 0.0
    %638 = vadd.xlane.f32.xlu0 %v637
    %v639 = vpop.xlane.xlu0 %638
    %v640 = vsel %vm606, %v630, 0.0
    %641 = vadd.xlane.f32.xlu0 %v640
    %v642 = vpop.xlane.xlu0 %641
    %v643 = vpack.c.bf16 %v626, %v624
    %v644 = vpack.c.bf16 %v630, %v628
    %v649 = vunpack.c.l.b16 %v364
    %v650 = vunpack.c.l.b16 %v365
    %v651 = vunpack.c.l.b16 %v366
    %v652 = vunpack.c.l.b16 %v367
    %v653 = vpack.c.b16 %v650, %v649
    %v654 = vpack.c.b16 %v652, %v651
    %v658 = vsel %vm606, %v643, 0
    %v661 = vsel %vm606, %v644, 0
    %663 = vmatpush.bf16.msra.mxu0 0
    %664 = vmatpush.bf16.msra.mxu0 0
    %665 = vmatpush.bf16.msra.mxu0 0
    %666 = vmatpush.bf16.msra.mxu0 0
    %667 = vmatpush.bf16.msra.mxu0 0
    %668 = vmatpush.bf16.msra.mxu0 0
    %669 = vmatpush.bf16.msra.mxu0 %v654
    %670 = vmatpush.bf16.msra.mxu0 %v653
    %671 = vmatmul.bf16.gmra.mxu0 %v658
    %v672 = vpop.f32.mrf.mxu0
    %v673 = vadd.f32 0.0, %v672
    %v674 = vpop.f32.mrf.mxu0
    %v675 = vadd.f32 0.0, %v674
    %676 = vmatmul.bf16.gmra.mxu0 %v661
    %v677 = vpop.f32.mrf.mxu0
    %v678 = vadd.f32 0.0, %v677
    %v679 = vpop.f32.mrf.mxu0
    %v680 = vadd.f32 0.0, %v679
    %681 = vdwg.mxu0
    %v682 = vrcp.pop %v633
    %v683 = vrcp.pop %v636
    %v684 = vrcp.pop %v639
    %v685 = vrcp.pop %v642
    %v686 = vmul.f32 %v673, %v682
    %v687 = vmul.f32 %v675, %v683
    %v688 = vmul.f32 %v678, %v684
    %v689 = vmul.f32 %v680, %v685
    %690 = vrot.lane.b32.xlu0 %v558, 112
    %v691 = vpop.permute.xlu0 %690
    %692 = vrot.lane.b32.xlu0 %v559, 112
    %v693 = vpop.permute.xlu0 %692
    %694 = vrot.lane.b32.xlu0 %v568, 48
    %v695 = vpop.permute.xlu0 %694
    %696 = vrot.lane.b32.xlu0 %v569, 48
    %v697 = vpop.permute.xlu0 %696
    %v699 = vsel %vm574, %v691, 0
    %v702 = vsel %vm574, %v693, 0
    %v705 = vsel %vm574, %v695, 0
    %v708 = vsel %vm574, %v697, 0
    %710 = vmatpush.bf16.xpose.msra.mxu0 0
    %711 = vmatpush.bf16.xpose.msra.mxu0 0
    %712 = vmatpush.bf16.xpose.msra.mxu0 0
    %713 = vmatpush.bf16.xpose.msra.mxu0 0
    %714 = vmatpush.bf16.xpose.msra.mxu0 0
    %715 = vmatpush.bf16.xpose.msra.mxu0 0
    %716 = vmatpush.bf16.xpose.msra.mxu0 %v708
    %717 = vmatpush.bf16.xpose.msra.mxu0 %v705
    %718 = vmatmul.bf16.gmra.mxu0 %v699
    %v719 = vpop.f32.mrf.mxu0
    %v720 = vadd.f32 %v546, %v719
    %v721 = vpop.f32.mrf.mxu0
    %v722 = vadd.f32 %v547, %v721
    %723 = vmatmul.bf16.gmra.mxu0 %v702
    %v724 = vpop.f32.mrf.mxu0
    %v725 = vadd.f32 %v548, %v724
    %v726 = vpop.f32.mrf.mxu0
    %v727 = vadd.f32 %v549, %v726
    %728 = vdwg.mxu0
    %v729 = vsel %vm606, %v720, -inf
    %730 = vmax.xlane.f32.xlu0 %v729
    %v731 = vpop.xlane.xlu0 %730
    %v732 = vsel %vm606, %v722, -inf
    %733 = vmax.xlane.f32.xlu0 %v732
    %v734 = vpop.xlane.xlu0 %733
    %v735 = vsel %vm606, %v725, -inf
    %736 = vmax.xlane.f32.xlu0 %v735
    %v737 = vpop.xlane.xlu0 %736
    %v738 = vsel %vm606, %v727, -inf
    %739 = vmax.xlane.f32.xlu0 %v738
    %v740 = vpop.xlane.xlu0 %739
    %v741 = vsub.f32 %v720, %v731
    %v742 = vsub.f32 %v722, %v734
    %v743 = vsub.f32 %v725, %v737
    %v744 = vsub.f32 %v727, %v740
    %v745 = vmul.f32 %v741, 1.442695
    %v746 = vpow.pop %v745
    %v747 = vmul.f32 %v742, 1.442695
    %v748 = vpow.pop %v747
    %v749 = vmul.f32 %v743, 1.442695
    %v750 = vpow.pop %v749
    %v751 = vmul.f32 %v744, 1.442695
    %v752 = vpow.pop %v751
    %v753 = vsel %vm606, %v746, 0.0
    %754 = vadd.xlane.f32.xlu0 %v753
    %v755 = vpop.xlane.xlu0 %754
    %v756 = vsel %vm606, %v748, 0.0
    %757 = vadd.xlane.f32.xlu0 %v756
    %v758 = vpop.xlane.xlu0 %757
    %v759 = vsel %vm606, %v750, 0.0
    %760 = vadd.xlane.f32.xlu0 %v759
    %v761 = vpop.xlane.xlu0 %760
    %v762 = vsel %vm606, %v752, 0.0
    %763 = vadd.xlane.f32.xlu0 %v762
    %v764 = vpop.xlane.xlu0 %763
    %v765 = vpack.c.bf16 %v748, %v746
    %v766 = vpack.c.bf16 %v752, %v750
    %767 = vrot.lane.b32.xlu0 %v653, 112
    %v768 = vpop.permute.xlu0 %767
    %769 = vrot.lane.b32.xlu0 %v654, 112
    %v770 = vpop.permute.xlu0 %769
    %v774 = vsel %vm606, %v765, 0
    %v777 = vsel %vm606, %v766, 0
    %779 = vmatpush.bf16.msra.mxu0 0
    %780 = vmatpush.bf16.msra.mxu0 0
    %781 = vmatpush.bf16.msra.mxu0 0
    %782 = vmatpush.bf16.msra.mxu0 0
    %783 = vmatpush.bf16.msra.mxu0 0
    %784 = vmatpush.bf16.msra.mxu0 0
    %785 = vmatpush.bf16.msra.mxu0 %v770
    %786 = vmatpush.bf16.msra.mxu0 %v768
    %787 = vmatmul.bf16.gmra.mxu0 %v774
    %v788 = vpop.f32.mrf.mxu0
    %v789 = vadd.f32 0.0, %v788
    %v790 = vpop.f32.mrf.mxu0
    %v791 = vadd.f32 0.0, %v790
    %792 = vmatmul.bf16.gmra.mxu0 %v777
    %v793 = vpop.f32.mrf.mxu0
    %v794 = vadd.f32 0.0, %v793
    %v795 = vpop.f32.mrf.mxu0
    %v796 = vadd.f32 0.0, %v795
    %797 = vdwg.mxu0
    %v798 = vrcp.pop %v755
    %v799 = vrcp.pop %v758
    %v800 = vrcp.pop %v761
    %v801 = vrcp.pop %v764
    %v802 = vmul.f32 %v789, %v798
    %v803 = vmul.f32 %v791, %v799
    %v804 = vmul.f32 %v794, %v800
    %v805 = vmul.f32 %v796, %v801
    %806 = vrot.lane.b32.xlu0 %v558, 96
    %v807 = vpop.permute.xlu0 %806
    %808 = vrot.lane.b32.xlu0 %v559, 96
    %v809 = vpop.permute.xlu0 %808
    %810 = vrot.lane.b32.xlu0 %v568, 32
    %v811 = vpop.permute.xlu0 %810
    %812 = vrot.lane.b32.xlu0 %v569, 32
    %v813 = vpop.permute.xlu0 %812
    %v815 = vsel %vm574, %v807, 0
    %v818 = vsel %vm574, %v809, 0
    %v821 = vsel %vm574, %v811, 0
    %v824 = vsel %vm574, %v813, 0
    %826 = vmatpush.bf16.xpose.msra.mxu0 0
    %827 = vmatpush.bf16.xpose.msra.mxu0 0
    %828 = vmatpush.bf16.xpose.msra.mxu0 0
    %829 = vmatpush.bf16.xpose.msra.mxu0 0
    %830 = vmatpush.bf16.xpose.msra.mxu0 0
    %831 = vmatpush.bf16.xpose.msra.mxu0 0
    %832 = vmatpush.bf16.xpose.msra.mxu0 %v824
    %833 = vmatpush.bf16.xpose.msra.mxu0 %v821
    %834 = vmatmul.bf16.gmra.mxu0 %v815
    %v835 = vpop.f32.mrf.mxu0
    %v836 = vadd.f32 %v546, %v835
    %v837 = vpop.f32.mrf.mxu0
    %v838 = vadd.f32 %v547, %v837
    %839 = vmatmul.bf16.gmra.mxu0 %v818
    %v840 = vpop.f32.mrf.mxu0
    %v841 = vadd.f32 %v548, %v840
    %v842 = vpop.f32.mrf.mxu0
    %v843 = vadd.f32 %v549, %v842
    %844 = vdwg.mxu0
    %v845 = vsel %vm606, %v836, -inf
    %846 = vmax.xlane.f32.xlu0 %v845
    %v847 = vpop.xlane.xlu0 %846
    %v848 = vsel %vm606, %v838, -inf
    %849 = vmax.xlane.f32.xlu0 %v848
    %v850 = vpop.xlane.xlu0 %849
    %v851 = vsel %vm606, %v841, -inf
    %852 = vmax.xlane.f32.xlu0 %v851
    %v853 = vpop.xlane.xlu0 %852
    %v854 = vsel %vm606, %v843, -inf
    %855 = vmax.xlane.f32.xlu0 %v854
    %v856 = vpop.xlane.xlu0 %855
    %v857 = vsub.f32 %v836, %v847
    %v858 = vsub.f32 %v838, %v850
    %v859 = vsub.f32 %v841, %v853
    %v860 = vsub.f32 %v843, %v856
    %v861 = vmul.f32 %v857, 1.442695
    %v862 = vpow.pop %v861
    %v863 = vmul.f32 %v858, 1.442695
    %v864 = vpow.pop %v863
    %v865 = vmul.f32 %v859, 1.442695
    %v866 = vpow.pop %v865
    %v867 = vmul.f32 %v860, 1.442695
    %v868 = vpow.pop %v867
    %v869 = vsel %vm606, %v862, 0.0
    %870 = vadd.xlane.f32.xlu0 %v869
    %v871 = vpop.xlane.xlu0 %870
    %v872 = vsel %vm606, %v864, 0.0
    %873 = vadd.xlane.f32.xlu0 %v872
    %v874 = vpop.xlane.xlu0 %873
    %v875 = vsel %vm606, %v866, 0.0
    %876 = vadd.xlane.f32.xlu0 %v875
    %v877 = vpop.xlane.xlu0 %876
    %v878 = vsel %vm606, %v868, 0.0
    %879 = vadd.xlane.f32.xlu0 %v878
    %v880 = vpop.xlane.xlu0 %879
    %v881 = vpack.c.bf16 %v864, %v862
    %v882 = vpack.c.bf16 %v868, %v866
    %883 = vrot.lane.b32.xlu0 %v653, 96
    %v884 = vpop.permute.xlu0 %883
    %885 = vrot.lane.b32.xlu0 %v654, 96
    %v886 = vpop.permute.xlu0 %885
    %v890 = vsel %vm606, %v881, 0
    %v893 = vsel %vm606, %v882, 0
    %895 = vmatpush.bf16.msra.mxu0 0
    %896 = vmatpush.bf16.msra.mxu0 0
    %897 = vmatpush.bf16.msra.mxu0 0
    %898 = vmatpush.bf16.msra.mxu0 0
    %899 = vmatpush.bf16.msra.mxu0 0
    %900 = vmatpush.bf16.msra.mxu0 0
    %901 = vmatpush.bf16.msra.mxu0 %v886
    %902 = vmatpush.bf16.msra.mxu0 %v884
    %903 = vmatmul.bf16.gmra.mxu0 %v890
    %v904 = vpop.f32.mrf.mxu0
    %v905 = vadd.f32 0.0, %v904
    %v906 = vpop.f32.mrf.mxu0
    %v907 = vadd.f32 0.0, %v906
    %908 = vmatmul.bf16.gmra.mxu0 %v893
    %v909 = vpop.f32.mrf.mxu0
    %v910 = vadd.f32 0.0, %v909
    %v911 = vpop.f32.mrf.mxu0
    %v912 = vadd.f32 0.0, %v911
    %913 = vdwg.mxu0
    %v914 = vrcp.pop %v871
    %v915 = vrcp.pop %v874
    %v916 = vrcp.pop %v877
    %v917 = vrcp.pop %v880
    %v918 = vmul.f32 %v905, %v914
    %v919 = vmul.f32 %v907, %v915
    %v920 = vmul.f32 %v910, %v916
    %v921 = vmul.f32 %v912, %v917
    %922 = vrot.lane.b32.xlu0 %v558, 80
    %v923 = vpop.permute.xlu0 %922
    %924 = vrot.lane.b32.xlu0 %v559, 80
    %v925 = vpop.permute.xlu0 %924
    %926 = vrot.lane.b32.xlu0 %v568, 16
    %v927 = vpop.permute.xlu0 %926
    %928 = vrot.lane.b32.xlu0 %v569, 16
    %v929 = vpop.permute.xlu0 %928
    %v931 = vsel %vm574, %v923, 0
    %v934 = vsel %vm574, %v925, 0
    %v937 = vsel %vm574, %v927, 0
    %v940 = vsel %vm574, %v929, 0
    %942 = vmatpush.bf16.xpose.msra.mxu0 0
    %943 = vmatpush.bf16.xpose.msra.mxu0 0
    %944 = vmatpush.bf16.xpose.msra.mxu0 0
    %945 = vmatpush.bf16.xpose.msra.mxu0 0
    %946 = vmatpush.bf16.xpose.msra.mxu0 0
    %947 = vmatpush.bf16.xpose.msra.mxu0 0
    %948 = vmatpush.bf16.xpose.msra.mxu0 %v940
    %949 = vmatpush.bf16.xpose.msra.mxu0 %v937
    %950 = vmatmul.bf16.gmra.mxu0 %v931
    %v951 = vpop.f32.mrf.mxu0
    %v952 = vadd.f32 %v546, %v951
    %v953 = vpop.f32.mrf.mxu0
    %v954 = vadd.f32 %v547, %v953
    %955 = vmatmul.bf16.gmra.mxu0 %v934
    %v956 = vpop.f32.mrf.mxu0
    %v957 = vadd.f32 %v548, %v956
    %v958 = vpop.f32.mrf.mxu0
    %v959 = vadd.f32 %v549, %v958
    %960 = vdwg.mxu0
    %v961 = vsel %vm606, %v952, -inf
    %962 = vmax.xlane.f32.xlu0 %v961
    %v963 = vpop.xlane.xlu0 %962
    %v964 = vsel %vm606, %v954, -inf
    %965 = vmax.xlane.f32.xlu0 %v964
    %v966 = vpop.xlane.xlu0 %965
    %v967 = vsel %vm606, %v957, -inf
    %968 = vmax.xlane.f32.xlu0 %v967
    %v969 = vpop.xlane.xlu0 %968
    %v970 = vsel %vm606, %v959, -inf
    %971 = vmax.xlane.f32.xlu0 %v970
    %v972 = vpop.xlane.xlu0 %971
    %v973 = vsub.f32 %v952, %v963
    %v974 = vsub.f32 %v954, %v966
    %v975 = vsub.f32 %v957, %v969
    %v976 = vsub.f32 %v959, %v972
    %v977 = vmul.f32 %v973, 1.442695
    %v978 = vpow.pop %v977
    %v979 = vmul.f32 %v974, 1.442695
    %v980 = vpow.pop %v979
    %v981 = vmul.f32 %v975, 1.442695
    %v982 = vpow.pop %v981
    %v983 = vmul.f32 %v976, 1.442695
    %v984 = vpow.pop %v983
    %v985 = vsel %vm606, %v978, 0.0
    %986 = vadd.xlane.f32.xlu0 %v985
    %v987 = vpop.xlane.xlu0 %986
    %v988 = vsel %vm606, %v980, 0.0
    %989 = vadd.xlane.f32.xlu0 %v988
    %v990 = vpop.xlane.xlu0 %989
    %v991 = vsel %vm606, %v982, 0.0
    %992 = vadd.xlane.f32.xlu0 %v991
    %v993 = vpop.xlane.xlu0 %992
    %v994 = vsel %vm606, %v984, 0.0
    %995 = vadd.xlane.f32.xlu0 %v994
    %v996 = vpop.xlane.xlu0 %995
    %v997 = vpack.c.bf16 %v980, %v978
    %v998 = vpack.c.bf16 %v984, %v982
    %999 = vrot.lane.b32.xlu0 %v653, 80
    %v1000 = vpop.permute.xlu0 %999
    %1001 = vrot.lane.b32.xlu0 %v654, 80
    %v1002 = vpop.permute.xlu0 %1001
    %v1006 = vsel %vm606, %v997, 0
    %v1009 = vsel %vm606, %v998, 0
    %1011 = vmatpush.bf16.msra.mxu0 0
    %1012 = vmatpush.bf16.msra.mxu0 0
    %1013 = vmatpush.bf16.msra.mxu0 0
    %1014 = vmatpush.bf16.msra.mxu0 0
    %1015 = vmatpush.bf16.msra.mxu0 0
    %1016 = vmatpush.bf16.msra.mxu0 0
    %1017 = vmatpush.bf16.msra.mxu0 %v1002
    %1018 = vmatpush.bf16.msra.mxu0 %v1000
    %1019 = vmatmul.bf16.gmra.mxu0 %v1006
    %v1020 = vpop.f32.mrf.mxu0
    %v1021 = vadd.f32 0.0, %v1020
    %v1022 = vpop.f32.mrf.mxu0
    %v1023 = vadd.f32 0.0, %v1022
    %1024 = vmatmul.bf16.gmra.mxu0 %v1009
    %v1025 = vpop.f32.mrf.mxu0
    %v1026 = vadd.f32 0.0, %v1025
    %v1027 = vpop.f32.mrf.mxu0
    %v1028 = vadd.f32 0.0, %v1027
    %1029 = vdwg.mxu0
    %v1030 = vrcp.pop %v987
    %v1031 = vrcp.pop %v990
    %v1032 = vrcp.pop %v993
    %v1033 = vrcp.pop %v996
    %v1034 = vmul.f32 %v1021, %v1030
    %v1035 = vmul.f32 %v1023, %v1031
    %v1036 = vmul.f32 %v1026, %v1032
    %v1037 = vmul.f32 %v1028, %v1033
    %1042 = vrot.lane.b32.xlu0 %v802, 16
    %v1043 = vpop.permute.xlu0 %1042
    %1044 = vrot.lane.b32.xlu0 %v803, 16
    %v1045 = vpop.permute.xlu0 %1044
    %1046 = vrot.lane.b32.xlu0 %v804, 16
    %v1047 = vpop.permute.xlu0 %1046
    %1048 = vrot.lane.b32.xlu0 %v805, 16
    %v1049 = vpop.permute.xlu0 %1048
    %1058 = vrot.lane.b32.xlu0 %v918, 32
    %v1059 = vpop.permute.xlu0 %1058
    %1060 = vrot.lane.b32.xlu0 %v919, 32
    %v1061 = vpop.permute.xlu0 %1060
    %1062 = vrot.lane.b32.xlu0 %v920, 32
    %v1063 = vpop.permute.xlu0 %1062
    %1064 = vrot.lane.b32.xlu0 %v921, 32
    %v1065 = vpop.permute.xlu0 %1064
    %1074 = vrot.lane.b32.xlu0 %v1034, 48
    %v1075 = vpop.permute.xlu0 %1074
    %1076 = vrot.lane.b32.xlu0 %v1035, 48
    %v1077 = vpop.permute.xlu0 %1076
    %1078 = vrot.lane.b32.xlu0 %v1036, 48
    %v1079 = vpop.permute.xlu0 %1078
    %1080 = vrot.lane.b32.xlu0 %v1037, 48
    %v1081 = vpop.permute.xlu0 %1080
    %v1086 = vsel %vm574, %v686, %v1043
    %v1087 = vsel %vm574, %v687, %v1045
    %v1088 = vsel %vm574, %v688, %v1047
    %v1089 = vsel %vm574, %v689, %v1049
    %v1090 = vsel %vm606, %v1086, %v1059
    %v1091 = vsel %vm606, %v1087, %v1061
    %v1092 = vsel %vm606, %v1088, %v1063
    %v1093 = vsel %vm606, %v1089, %v1065
    %vm1094 = vcmask 392192
    %v1095 = vsel %vm1094, %v1090, %v1075
    %v1096 = vsel %vm1094, %v1091, %v1077
    %v1097 = vsel %vm1094, %v1092, %v1079
    %v1098 = vsel %vm1094, %v1093, %v1081
    %v1099 = vpack.c.bf16 %v1096, %v1095
    %v1100 = vpack.c.bf16 %v1098, %v1097
    %v1101 = vld [vmem:[%s5] sm:$0xf]
    %v1102 = vld [vmem:[%s5 + $0x4] sm:$0xf]
    %v1103 = vld [vmem:[%s5 + $0x8] sm:$0xf]
    %v1104 = vld [vmem:[%s5 + $0xc] sm:$0xf]
    %v1105 = vld [vmem:[%s5 + $0x10] sm:$0xf]
    %v1106 = vld [vmem:[%s5 + $0x14] sm:$0xf]
    %v1107 = vld [vmem:[%s5 + $0x18] sm:$0xf]
    %v1108 = vld [vmem:[%s5 + $0x1c] sm:$0xf]
    %v1117 = vunpack.c.l.b16 %v1101
    %v1118 = vunpack.c.l.b16 %v1102
    %v1119 = vunpack.c.l.b16 %v1103
    %v1120 = vunpack.c.l.b16 %v1104
    %v1121 = vunpack.c.l.b16 %v1105
    %v1122 = vunpack.c.l.b16 %v1106
    %v1123 = vunpack.c.l.b16 %v1107
    %v1124 = vunpack.c.l.b16 %v1108
    %v1125 = vpack.c.b16 %v1118, %v1117
    %v1126 = vpack.c.b16 %v1120, %v1119
    %v1127 = vpack.c.b16 %v1122, %v1121
    %v1128 = vpack.c.b16 %v1124, %v1123
    %v1134 = vsel %vm154, %v1099, 0
    %v1137 = vsel %vm154, %v1100, 0
    %1139 = vmatpush.bf16.msra.mxu0 0
    %1140 = vmatpush.bf16.msra.mxu0 0
    %1141 = vmatpush.bf16.msra.mxu0 0
    %1142 = vmatpush.bf16.msra.mxu0 0
    %1143 = vmatpush.bf16.msra.mxu0 %v1128
    %1144 = vmatpush.bf16.msra.mxu0 %v1127
    %1145 = vmatpush.bf16.msra.mxu0 %v1126
    %1146 = vmatpush.bf16.msra.mxu0 %v1125
    %1147 = vmatmul.bf16.gmra.mxu0 %v1134
    %v1148 = vpop.f32.mrf.mxu0
    %v1149 = vadd.f32 0.0, %v1148
    %v1150 = vpop.f32.mrf.mxu0
    %v1151 = vadd.f32 0.0, %v1150
    %1152 = vmatmul.bf16.gmra.mxu0 %v1137
    %v1153 = vpop.f32.mrf.mxu0
    %v1154 = vadd.f32 0.0, %v1153
    %v1155 = vpop.f32.mrf.mxu0
    %v1156 = vadd.f32 0.0, %v1155
    %1157 = vdwg.mxu0
    %v1158 = vadd.f32 %v148, %v1149
    %v1159 = vadd.f32 %v149, %v1151
    %v1160 = vadd.f32 %v150, %v1154
    %v1161 = vadd.f32 %v151, %v1156
    %v1162 = vld [vmem:[%s6] sm:$0x1]
    %v1164 = vperm.slane %v1162, 0
    %v1166 = vadd.f32 %v1158, %v1164
    %v1167 = vadd.f32 %v1159, %v1164
    %v1168 = vadd.f32 %v1160, %v1164
    %v1169 = vadd.f32 %v1161, %v1164
    %v1170 = vld [vmem:[%s11] sm:$0x1]
    %v1171 = vld [vmem:[%s12] sm:$0x1]
    %v1172 = vsel %vm154, %v1166, 0.0
    %1173 = vadd.xlane.f32.xlu0 %v1172
    %v1174 = vpop.xlane.xlu0 %1173
    %v1175 = vsel %vm154, %v1167, 0.0
    %1176 = vadd.xlane.f32.xlu0 %v1175
    %v1177 = vpop.xlane.xlu0 %1176
    %v1178 = vsel %vm154, %v1168, 0.0
    %1179 = vadd.xlane.f32.xlu0 %v1178
    %v1180 = vpop.xlane.xlu0 %1179
    %v1181 = vsel %vm154, %v1169, 0.0
    %1182 = vadd.xlane.f32.xlu0 %v1181
    %v1183 = vpop.xlane.xlu0 %1182
    %v1184 = vmul.f32 %v1174, %v173
    %v1185 = vmul.f32 %v1177, %v173
    %v1186 = vmul.f32 %v1180, %v173
    %v1187 = vmul.f32 %v1183, %v173
    %v1188 = vsub.f32 %v1166, %v1184
    %v1189 = vsub.f32 %v1167, %v1185
    %v1190 = vsub.f32 %v1168, %v1186
    %v1191 = vsub.f32 %v1169, %v1187
    %v1192 = vmul.f32 %v1188, %v1188
    %v1193 = vmul.f32 %v1189, %v1189
    %v1194 = vmul.f32 %v1190, %v1190
    %v1195 = vmul.f32 %v1191, %v1191
    %v1196 = vsel %vm154, %v1192, 0.0
    %1197 = vadd.xlane.f32.xlu0 %v1196
    %v1198 = vpop.xlane.xlu0 %1197
    %v1199 = vsel %vm154, %v1193, 0.0
    %1200 = vadd.xlane.f32.xlu0 %v1199
    %v1201 = vpop.xlane.xlu0 %1200
    %v1202 = vsel %vm154, %v1194, 0.0
    %1203 = vadd.xlane.f32.xlu0 %v1202
    %v1204 = vpop.xlane.xlu0 %1203
    %v1205 = vsel %vm154, %v1195, 0.0
    %1206 = vadd.xlane.f32.xlu0 %v1205
    %v1207 = vpop.xlane.xlu0 %1206
    %v1208 = vmul.f32 %v1198, %v173
    %v1209 = vmul.f32 %v1201, %v173
    %v1210 = vmul.f32 %v1204, %v173
    %v1211 = vmul.f32 %v1207, %v173
    %v1212 = vadd.f32 %v1208, 1e-05
    %v1213 = vadd.f32 %v1209, 1e-05
    %v1214 = vadd.f32 %v1210, 1e-05
    %v1215 = vadd.f32 %v1211, 1e-05
    %v1216 = vrsqrt.pop %v1212
    %v1217 = vmul.f32 %v1216, %v1212
    %v1218 = vmul.f32 %v1217, %v1216
    %v1219 = vmul.f32 0.5, %v1218
    %v1220 = vsub.f32 1.5, %v1219
    %v1221 = vmul.f32 %v1216, %v1220
    %vm1222 = vweird.f32 %v1212
    %vm1223 = vweird.f32 %v1216
    %vm1224 = vmor %vm1222, %vm1223
    %v1225 = vsel %vm1224, %v1216, %v1221
    %v1226 = vrsqrt.pop %v1213
    %v1227 = vmul.f32 %v1226, %v1213
    %v1228 = vmul.f32 %v1227, %v1226
    %v1229 = vmul.f32 0.5, %v1228
    %v1230 = vsub.f32 1.5, %v1229
    %v1231 = vmul.f32 %v1226, %v1230
    %vm1232 = vweird.f32 %v1213
    %vm1233 = vweird.f32 %v1226
    %vm1234 = vmor %vm1232, %vm1233
    %v1235 = vsel %vm1234, %v1226, %v1231
    %v1236 = vrsqrt.pop %v1214
    %v1237 = vmul.f32 %v1236, %v1214
    %v1238 = vmul.f32 %v1237, %v1236
    %v1239 = vmul.f32 0.5, %v1238
    %v1240 = vsub.f32 1.5, %v1239
    %v1241 = vmul.f32 %v1236, %v1240
    %vm1242 = vweird.f32 %v1214
    %vm1243 = vweird.f32 %v1236
    %vm1244 = vmor %vm1242, %vm1243
    %v1245 = vsel %vm1244, %v1236, %v1241
    %v1246 = vrsqrt.pop %v1215
    %v1247 = vmul.f32 %v1246, %v1215
    %v1248 = vmul.f32 %v1247, %v1246
    %v1249 = vmul.f32 0.5, %v1248
    %v1250 = vsub.f32 1.5, %v1249
    %v1251 = vmul.f32 %v1246, %v1250
    %vm1252 = vweird.f32 %v1215
    %vm1253 = vweird.f32 %v1246
    %vm1254 = vmor %vm1252, %vm1253
    %v1255 = vsel %vm1254, %v1246, %v1251
    %v1256 = vmul.f32 %v1188, %v1225
    %v1257 = vmul.f32 %v1189, %v1235
    %v1258 = vmul.f32 %v1190, %v1245
    %v1259 = vmul.f32 %v1191, %v1255
    %v1261 = vperm.slane %v1170, 0
    %v1263 = vmul.f32 %v1256, %v1261
    %v1264 = vmul.f32 %v1257, %v1261
    %v1265 = vmul.f32 %v1258, %v1261
    %v1266 = vmul.f32 %v1259, %v1261
    %v1268 = vperm.slane %v1171, 0
    %v1270 = vadd.f32 %v1263, %v1268
    %v1271 = vadd.f32 %v1264, %v1268
    %v1272 = vadd.f32 %v1265, %v1268
    %v1273 = vadd.f32 %v1266, %v1268
    %v1274 = vpack.c.bf16 %v1271, %v1270
    %v1275 = vpack.c.bf16 %v1273, %v1272
    %v1276 = vld [vmem:[%s13] sm:$0xff]
    %v1277 = vld [vmem:[%s13 + $0x8] sm:$0xff]
    %v1278 = vld [vmem:[%s13 + $0x10] sm:$0xff]
    %v1279 = vld [vmem:[%s13 + $0x18] sm:$0xff]
    %v1280 = vld [vmem:[%s13 + $0x20] sm:$0xff]
    %v1281 = vld [vmem:[%s13 + $0x28] sm:$0xff]
    %v1282 = vld [vmem:[%s13 + $0x30] sm:$0xff]
    %v1283 = vld [vmem:[%s13 + $0x38] sm:$0xff]
    %v1284 = vld [vmem:[%s14] sm:$0x3]
    %v1286 = vperm.slane %v1284, 0
    %v1287 = vperm.slane %v1284, 1
    %v1298 = vunpack.c.l.b16 %v1276
    %v1299 = vunpack.c.h.b16 %v1276
    %v1300 = vunpack.c.l.b16 %v1277
    %v1301 = vunpack.c.h.b16 %v1277
    %v1302 = vunpack.c.l.b16 %v1278
    %v1303 = vunpack.c.h.b16 %v1278
    %v1304 = vunpack.c.l.b16 %v1279
    %v1305 = vunpack.c.h.b16 %v1279
    %v1306 = vunpack.c.l.b16 %v1280
    %v1307 = vunpack.c.h.b16 %v1280
    %v1308 = vunpack.c.l.b16 %v1281
    %v1309 = vunpack.c.h.b16 %v1281
    %v1310 = vunpack.c.l.b16 %v1282
    %v1311 = vunpack.c.h.b16 %v1282
    %v1312 = vunpack.c.l.b16 %v1283
    %v1313 = vunpack.c.h.b16 %v1283
    %v1314 = vpack.c.b16 %v1300, %v1298
    %v1315 = vpack.c.b16 %v1301, %v1299
    %v1316 = vpack.c.b16 %v1304, %v1302
    %v1317 = vpack.c.b16 %v1305, %v1303
    %v1318 = vpack.c.b16 %v1308, %v1306
    %v1319 = vpack.c.b16 %v1309, %v1307
    %v1320 = vpack.c.b16 %v1312, %v1310
    %v1321 = vpack.c.b16 %v1313, %v1311
    %v1331 = vsel %vm154, %v1274, 0
    %v1334 = vsel %vm154, %v1275, 0
    %1336 = vmatpush.bf16.msra.mxu0 0
    %1337 = vmatpush.bf16.msra.mxu0 0
    %1338 = vmatpush.bf16.msra.mxu0 0
    %1339 = vmatpush.bf16.msra.mxu0 0
    %1340 = vmatpush.bf16.msra.mxu0 %v1320
    %1341 = vmatpush.bf16.msra.mxu0 %v1318
    %1342 = vmatpush.bf16.msra.mxu0 %v1316
    %1343 = vmatpush.bf16.msra.mxu0 %v1314
    %1344 = vmatmul.bf16.gmra.mxu0 %v1331
    %v1345 = vpop.f32.mrf.mxu0
    %v1346 = vadd.f32 %v1286, %v1345
    %v1347 = vpop.f32.mrf.mxu0
    %v1348 = vadd.f32 %v1286, %v1347
    %1349 = vmatmul.bf16.gmra.mxu0 %v1334
    %v1350 = vpop.f32.mrf.mxu0
    %v1351 = vadd.f32 %v1286, %v1350
    %v1352 = vpop.f32.mrf.mxu0
    %v1353 = vadd.f32 %v1286, %v1352
    %1354 = vdwg.mxu0
    %1355 = vmatpush.bf16.msra.mxu0 0
    %1356 = vmatpush.bf16.msra.mxu0 0
    %1357 = vmatpush.bf16.msra.mxu0 0
    %1358 = vmatpush.bf16.msra.mxu0 0
    %1359 = vmatpush.bf16.msra.mxu0 %v1321
    %1360 = vmatpush.bf16.msra.mxu0 %v1319
    %1361 = vmatpush.bf16.msra.mxu0 %v1317
    %1362 = vmatpush.bf16.msra.mxu0 %v1315
    %1363 = vmatmul.bf16.gmra.mxu0 %v1331
    %v1364 = vpop.f32.mrf.mxu0
    %v1365 = vadd.f32 %v1287, %v1364
    %v1366 = vpop.f32.mrf.mxu0
    %v1367 = vadd.f32 %v1287, %v1366
    %1368 = vmatmul.bf16.gmra.mxu0 %v1334
    %v1369 = vpop.f32.mrf.mxu0
    %v1370 = vadd.f32 %v1287, %v1369
    %v1371 = vpop.f32.mrf.mxu0
    %v1372 = vadd.f32 %v1287, %v1371
    %1373 = vdwg.mxu0
    %v1374 = vxor.u32 %v1346, 2147483648
    %v1375 = vxor.u32 %v1365, 2147483648
    %v1376 = vxor.u32 %v1348, 2147483648
    %v1377 = vxor.u32 %v1367, 2147483648
    %v1378 = vxor.u32 %v1351, 2147483648
    %v1379 = vxor.u32 %v1370, 2147483648
    %v1380 = vxor.u32 %v1353, 2147483648
    %v1381 = vxor.u32 %v1372, 2147483648
    %v1382 = vmul.f32 %v1374, 1.442695
    %v1383 = vpow.pop %v1382
    %v1384 = vmul.f32 %v1375, 1.442695
    %v1385 = vpow.pop %v1384
    %v1386 = vmul.f32 %v1376, 1.442695
    %v1387 = vpow.pop %v1386
    %v1388 = vmul.f32 %v1377, 1.442695
    %v1389 = vpow.pop %v1388
    %v1390 = vmul.f32 %v1378, 1.442695
    %v1391 = vpow.pop %v1390
    %v1392 = vmul.f32 %v1379, 1.442695
    %v1393 = vpow.pop %v1392
    %v1394 = vmul.f32 %v1380, 1.442695
    %v1395 = vpow.pop %v1394
    %v1396 = vmul.f32 %v1381, 1.442695
    %v1397 = vpow.pop %v1396
    %v1398 = vadd.f32 %v1383, 1.0
    %v1399 = vadd.f32 %v1385, 1.0
    %v1400 = vadd.f32 %v1387, 1.0
    %v1401 = vadd.f32 %v1389, 1.0
    %v1402 = vadd.f32 %v1391, 1.0
    %v1403 = vadd.f32 %v1393, 1.0
    %v1404 = vadd.f32 %v1395, 1.0
    %v1405 = vadd.f32 %v1397, 1.0
    %v1406 = vrcp.pop %v1398
    %v1407 = vmul.f32 %v1398, %v1406
    %v1408 = vsub.f32 1.0, %v1407
    %v1409 = vmul.f32 %v1406, %v1408
    %v1410 = vadd.f32 %v1406, %v1409
    %vm1411 = vweird.f32 %v1398
    %vm1412 = vweird.f32 %v1406
    %vm1413 = vmor %vm1411, %vm1412
    %v1414 = vsel %vm1413, %v1406, %v1410
    %v1415 = vand.u32 2147483647, %v1398
    %vm1416 = vcmp.eq.f32.partialorder %v1415, 8.507059e+37
    %v1417 = vand.u32 %v1398, 2147483648
    %v1418 = vor.u32 1.1754944e-38, %v1417
    %v1419 = vsel %vm1416, %v1418, %v1414
    %v1420 = vmul.f32 1.0, %v1419
    %v1421 = vrcp.pop %v1399
    %v1422 = vmul.f32 %v1399, %v1421
    %v1423 = vsub.f32 1.0, %v1422
    %v1424 = vmul.f32 %v1421, %v1423
    %v1425 = vadd.f32 %v1421, %v1424
    %vm1426 = vweird.f32 %v1399
    %vm1427 = vweird.f32 %v1421
    %vm1428 = vmor %vm1426, %vm1427
    %v1429 = vsel %vm1428, %v1421, %v1425
    %v1430 = vand.u32 2147483647, %v1399
    %vm1431 = vcmp.eq.f32.partialorder %v1430, 8.507059e+37
    %v1432 = vand.u32 %v1399, 2147483648
    %v1433 = vor.u32 1.1754944e-38, %v1432
    %v1434 = vsel %vm1431, %v1433, %v1429
    %v1435 = vmul.f32 1.0, %v1434
    %v1436 = vrcp.pop %v1400
    %v1437 = vmul.f32 %v1400, %v1436
    %v1438 = vsub.f32 1.0, %v1437
    %v1439 = vmul.f32 %v1436, %v1438
    %v1440 = vadd.f32 %v1436, %v1439
    %vm1441 = vweird.f32 %v1400
    %vm1442 = vweird.f32 %v1436
    %vm1443 = vmor %vm1441, %vm1442
    %v1444 = vsel %vm1443, %v1436, %v1440
    %v1445 = vand.u32 2147483647, %v1400
    %vm1446 = vcmp.eq.f32.partialorder %v1445, 8.507059e+37
    %v1447 = vand.u32 %v1400, 2147483648
    %v1448 = vor.u32 1.1754944e-38, %v1447
    %v1449 = vsel %vm1446, %v1448, %v1444
    %v1450 = vmul.f32 1.0, %v1449
    %v1451 = vrcp.pop %v1401
    %v1452 = vmul.f32 %v1401, %v1451
    %v1453 = vsub.f32 1.0, %v1452
    %v1454 = vmul.f32 %v1451, %v1453
    %v1455 = vadd.f32 %v1451, %v1454
    %vm1456 = vweird.f32 %v1401
    %vm1457 = vweird.f32 %v1451
    %vm1458 = vmor %vm1456, %vm1457
    %v1459 = vsel %vm1458, %v1451, %v1455
    %v1460 = vand.u32 2147483647, %v1401
    %vm1461 = vcmp.eq.f32.partialorder %v1460, 8.507059e+37
    %v1462 = vand.u32 %v1401, 2147483648
    %v1463 = vor.u32 1.1754944e-38, %v1462
    %v1464 = vsel %vm1461, %v1463, %v1459
    %v1465 = vmul.f32 1.0, %v1464
    %v1466 = vrcp.pop %v1402
    %v1467 = vmul.f32 %v1402, %v1466
    %v1468 = vsub.f32 1.0, %v1467
    %v1469 = vmul.f32 %v1466, %v1468
    %v1470 = vadd.f32 %v1466, %v1469
    %vm1471 = vweird.f32 %v1402
    %vm1472 = vweird.f32 %v1466
    %vm1473 = vmor %vm1471, %vm1472
    %v1474 = vsel %vm1473, %v1466, %v1470
    %v1475 = vand.u32 2147483647, %v1402
    %vm1476 = vcmp.eq.f32.partialorder %v1475, 8.507059e+37
    %v1477 = vand.u32 %v1402, 2147483648
    %v1478 = vor.u32 1.1754944e-38, %v1477
    %v1479 = vsel %vm1476, %v1478, %v1474
    %v1480 = vmul.f32 1.0, %v1479
    %v1481 = vrcp.pop %v1403
    %v1482 = vmul.f32 %v1403, %v1481
    %v1483 = vsub.f32 1.0, %v1482
    %v1484 = vmul.f32 %v1481, %v1483
    %v1485 = vadd.f32 %v1481, %v1484
    %vm1486 = vweird.f32 %v1403
    %vm1487 = vweird.f32 %v1481
    %vm1488 = vmor %vm1486, %vm1487
    %v1489 = vsel %vm1488, %v1481, %v1485
    %v1490 = vand.u32 2147483647, %v1403
    %vm1491 = vcmp.eq.f32.partialorder %v1490, 8.507059e+37
    %v1492 = vand.u32 %v1403, 2147483648
    %v1493 = vor.u32 1.1754944e-38, %v1492
    %v1494 = vsel %vm1491, %v1493, %v1489
    %v1495 = vmul.f32 1.0, %v1494
    %v1496 = vrcp.pop %v1404
    %v1497 = vmul.f32 %v1404, %v1496
    %v1498 = vsub.f32 1.0, %v1497
    %v1499 = vmul.f32 %v1496, %v1498
    %v1500 = vadd.f32 %v1496, %v1499
    %vm1501 = vweird.f32 %v1404
    %vm1502 = vweird.f32 %v1496
    %vm1503 = vmor %vm1501, %vm1502
    %v1504 = vsel %vm1503, %v1496, %v1500
    %v1505 = vand.u32 2147483647, %v1404
    %vm1506 = vcmp.eq.f32.partialorder %v1505, 8.507059e+37
    %v1507 = vand.u32 %v1404, 2147483648
    %v1508 = vor.u32 1.1754944e-38, %v1507
    %v1509 = vsel %vm1506, %v1508, %v1504
    %v1510 = vmul.f32 1.0, %v1509
    %v1511 = vrcp.pop %v1405
    %v1512 = vmul.f32 %v1405, %v1511
    %v1513 = vsub.f32 1.0, %v1512
    %v1514 = vmul.f32 %v1511, %v1513
    %v1515 = vadd.f32 %v1511, %v1514
    %vm1516 = vweird.f32 %v1405
    %vm1517 = vweird.f32 %v1511
    %vm1518 = vmor %vm1516, %vm1517
    %v1519 = vsel %vm1518, %v1511, %v1515
    %v1520 = vand.u32 2147483647, %v1405
    %vm1521 = vcmp.eq.f32.partialorder %v1520, 8.507059e+37
    %v1522 = vand.u32 %v1405, 2147483648
    %v1523 = vor.u32 1.1754944e-38, %v1522
    %v1524 = vsel %vm1521, %v1523, %v1519
    %v1525 = vmul.f32 1.0, %v1524
    %v1526 = vmul.f32 %v1346, %v1420
    %v1527 = vmul.f32 %v1365, %v1435
    %v1528 = vmul.f32 %v1348, %v1450
    %v1529 = vmul.f32 %v1367, %v1465
    %v1530 = vmul.f32 %v1351, %v1480
    %v1531 = vmul.f32 %v1370, %v1495
    %v1532 = vmul.f32 %v1353, %v1510
    %v1533 = vmul.f32 %v1372, %v1525
    %v1534 = vpack.c.bf16 %v1528, %v1526
    %v1535 = vpack.c.bf16 %v1529, %v1527
    %v1536 = vpack.c.bf16 %v1532, %v1530
    %v1537 = vpack.c.bf16 %v1533, %v1531
    %v1538 = vld [vmem:[%s15] sm:$0xf]
    %v1539 = vld [vmem:[%s15 + $0x4] sm:$0xf]
    %v1540 = vld [vmem:[%s15 + $0x8] sm:$0xf]
    %v1541 = vld [vmem:[%s15 + $0xc] sm:$0xf]
    %v1542 = vld [vmem:[%s15 + $0x10] sm:$0xf]
    %v1543 = vld [vmem:[%s15 + $0x14] sm:$0xf]
    %v1544 = vld [vmem:[%s15 + $0x18] sm:$0xf]
    %v1545 = vld [vmem:[%s15 + $0x1c] sm:$0xf]
    %v1546 = vld [vmem:[%s15 + $0x20] sm:$0xf]
    %v1547 = vld [vmem:[%s15 + $0x24] sm:$0xf]
    %v1548 = vld [vmem:[%s15 + $0x28] sm:$0xf]
    %v1549 = vld [vmem:[%s15 + $0x2c] sm:$0xf]
    %v1550 = vld [vmem:[%s15 + $0x30] sm:$0xf]
    %v1551 = vld [vmem:[%s15 + $0x34] sm:$0xf]
    %v1552 = vld [vmem:[%s15 + $0x38] sm:$0xf]
    %v1553 = vld [vmem:[%s15 + $0x3c] sm:$0xf]
    %v1554 = vld [vmem:[%s15 + $0x40] sm:$0xf]
    %v1555 = vld [vmem:[%s15 + $0x44] sm:$0xf]
    %v1556 = vld [vmem:[%s15 + $0x48] sm:$0xf]
    %v1557 = vld [vmem:[%s15 + $0x4c] sm:$0xf]
    %v1558 = vld [vmem:[%s15 + $0x50] sm:$0xf]
    %v1559 = vld [vmem:[%s15 + $0x54] sm:$0xf]
    %v1560 = vld [vmem:[%s15 + $0x58] sm:$0xf]
    %v1561 = vld [vmem:[%s15 + $0x5c] sm:$0xf]
    %v1562 = vld [vmem:[%s15 + $0x60] sm:$0xf]
    %v1563 = vld [vmem:[%s15 + $0x64] sm:$0xf]
    %v1564 = vld [vmem:[%s15 + $0x68] sm:$0xf]
    %v1565 = vld [vmem:[%s15 + $0x6c] sm:$0xf]
    %v1566 = vld [vmem:[%s15 + $0x70] sm:$0xf]
    %v1567 = vld [vmem:[%s15 + $0x74] sm:$0xf]
    %v1568 = vld [vmem:[%s15 + $0x78] sm:$0xf]
    %v1569 = vld [vmem:[%s15 + $0x7c] sm:$0xf]
    %v1570 = vld [vmem:[%s16] sm:$0x1]
    %v1572 = vperm.slane %v1570, 0
    %v1606 = vunpack.c.l.b16 %v1538
    %v1607 = vunpack.c.l.b16 %v1539
    %v1608 = vunpack.c.l.b16 %v1540
    %v1609 = vunpack.c.l.b16 %v1541
    %v1610 = vunpack.c.l.b16 %v1542
    %v1611 = vunpack.c.l.b16 %v1543
    %v1612 = vunpack.c.l.b16 %v1544
    %v1613 = vunpack.c.l.b16 %v1545
    %v1614 = vunpack.c.l.b16 %v1546
    %v1615 = vunpack.c.l.b16 %v1547
    %v1616 = vunpack.c.l.b16 %v1548
    %v1617 = vunpack.c.l.b16 %v1549
    %v1618 = vunpack.c.l.b16 %v1550
    %v1619 = vunpack.c.l.b16 %v1551
    %v1620 = vunpack.c.l.b16 %v1552
    %v1621 = vunpack.c.l.b16 %v1553
    %v1622 = vunpack.c.l.b16 %v1554
    %v1623 = vunpack.c.l.b16 %v1555
    %v1624 = vunpack.c.l.b16 %v1556
    %v1625 = vunpack.c.l.b16 %v1557
    %v1626 = vunpack.c.l.b16 %v1558
    %v1627 = vunpack.c.l.b16 %v1559
    %v1628 = vunpack.c.l.b16 %v1560
    %v1629 = vunpack.c.l.b16 %v1561
    %v1630 = vunpack.c.l.b16 %v1562
    %v1631 = vunpack.c.l.b16 %v1563
    %v1632 = vunpack.c.l.b16 %v1564
    %v1633 = vunpack.c.l.b16 %v1565
    %v1634 = vunpack.c.l.b16 %v1566
    %v1635 = vunpack.c.l.b16 %v1567
    %v1636 = vunpack.c.l.b16 %v1568
    %v1637 = vunpack.c.l.b16 %v1569
    %v1638 = vpack.c.b16 %v1607, %v1606
    %v1639 = vpack.c.b16 %v1609, %v1608
    %v1640 = vpack.c.b16 %v1611, %v1610
    %v1641 = vpack.c.b16 %v1613, %v1612
    %v1642 = vpack.c.b16 %v1615, %v1614
    %v1643 = vpack.c.b16 %v1617, %v1616
    %v1644 = vpack.c.b16 %v1619, %v1618
    %v1645 = vpack.c.b16 %v1621, %v1620
    %v1646 = vpack.c.b16 %v1623, %v1622
    %v1647 = vpack.c.b16 %v1625, %v1624
    %v1648 = vpack.c.b16 %v1627, %v1626
    %v1649 = vpack.c.b16 %v1629, %v1628
    %v1650 = vpack.c.b16 %v1631, %v1630
    %v1651 = vpack.c.b16 %v1633, %v1632
    %v1652 = vpack.c.b16 %v1635, %v1634
    %v1653 = vpack.c.b16 %v1637, %v1636
    %1670 = vmatpush.bf16.msra.mxu0 %v1645
    %1671 = vmatpush.bf16.msra.mxu0 %v1644
    %1672 = vmatpush.bf16.msra.mxu0 %v1643
    %1673 = vmatpush.bf16.msra.mxu0 %v1642
    %1674 = vmatpush.bf16.msra.mxu0 %v1641
    %1675 = vmatpush.bf16.msra.mxu0 %v1640
    %1676 = vmatpush.bf16.msra.mxu0 %v1639
    %1677 = vmatpush.bf16.msra.mxu0 %v1638
    %1678 = vmatmul.bf16.gmra.mxu0 %v1534
    %v1679 = vpop.f32.mrf.mxu0
    %v1680 = vadd.f32 %v1572, %v1679
    %v1681 = vpop.f32.mrf.mxu0
    %v1682 = vadd.f32 %v1572, %v1681
    %1683 = vmatmul.bf16.gmra.mxu0 %v1536
    %v1684 = vpop.f32.mrf.mxu0
    %v1685 = vadd.f32 %v1572, %v1684
    %v1686 = vpop.f32.mrf.mxu0
    %v1687 = vadd.f32 %v1572, %v1686
    %1688 = vdwg.mxu0
    %1689 = vmatpush.bf16.msra.mxu0 %v1653
    %1690 = vmatpush.bf16.msra.mxu0 %v1652
    %1691 = vmatpush.bf16.msra.mxu0 %v1651
    %1692 = vmatpush.bf16.msra.mxu0 %v1650
    %1693 = vmatpush.bf16.msra.mxu0 %v1649
    %1694 = vmatpush.bf16.msra.mxu0 %v1648
    %1695 = vmatpush.bf16.msra.mxu0 %v1647
    %1696 = vmatpush.bf16.msra.mxu0 %v1646
    %1697 = vmatmul.bf16.gmra.mxu0 %v1535
    %v1698 = vpop.f32.mrf.mxu0
    %v1699 = vadd.f32 %v1680, %v1698
    %v1700 = vpop.f32.mrf.mxu0
    %v1701 = vadd.f32 %v1682, %v1700
    %1702 = vmatmul.bf16.gmra.mxu0 %v1537
    %v1703 = vpop.f32.mrf.mxu0
    %v1704 = vadd.f32 %v1685, %v1703
    %v1705 = vpop.f32.mrf.mxu0
    %v1706 = vadd.f32 %v1687, %v1705
    %1707 = vdwg.mxu0
    %v1708 = vadd.f32 %v1166, %v1699
    %v1709 = vadd.f32 %v1167, %v1701
    %v1710 = vadd.f32 %v1168, %v1704
    %v1711 = vadd.f32 %v1169, %v1706
    %1712 = vst.msk [vmem:[#allocation13] sm:$0xff] %vm154, %v1708
    %1713 = vst.msk [vmem:[#allocation13 + $0x8] sm:$0xff] %vm154, %v1709
    %1714 = vst.msk [vmem:[#allocation13 + $0x10] sm:$0xff] %vm154, %v1710
    %1715 = vst.msk [vmem:[#allocation13 + $0x18] sm:$0xff] %vm154, %v1711
    // Predicated region
    $region94: #{transformer_block_pallas.1} parent=1 // pred_check
      _
    $region95: #{transformer_block_pallas.1} parent=1 // pred_check_branch
      %1717 = sbr.rel (0) target = $region97
    $region96: #{transformer_block_pallas.1} parent=1 // pred_region
      %1719 = vsyncadd [#allocation4], 0
      %s1720 = sshll.u32 [#allocation13], 4
      %s1721 = int_to_ptr.vmem [resolvable:$true] %s1720
      %s1722 = sshll.u32 %s17, 4
      %s1723 = int_to_ptr.hbm [resolvable:$true] %s1722
      %1728 = dma.vmem_to_hbm [thread:$0]  %s1721, 512, %s1723, [#allocation4], 128, 128, 8
    $region97: #{transformer_block_pallas.1} parent=1 // pred_fallthru
      _
    // Predicated region
    $region98: #{transformer_block_pallas.1} parent=1 // pred_check
      _
    $region99: #{transformer_block_pallas.1} parent=1 // pred_check_branch
      %1730 = sbr.rel (0) target = $region101
    $region100: #{transformer_block_pallas.1} parent=1 // pred_region
      %1732 = dma.done [#allocation4], 512
    $region101: #{transformer_block_pallas.1} parent=1 // pred_fallthru
      _
    %1733 = vsyncpa [#allocation3], 1
    %1734 = vsyncpa [#allocation6], 1
    %1735 = vsyncpa [#allocation9], 1
    %1736 = vsyncpa [#allocation12], 1
    %1737 = vsyncpa [#allocation4], 1

</llo_original>
